<compile_context>
chip_gen: v7x
topology: tpu7x:2x2x1
jax: 0.10.0
libtpu: 0.0.40
codegen_flags: <defaults>
</compile_context>

<pallas_src>
import jax
import jax.numpy as jnp
from jax import lax
from jax.experimental import pallas as pl
from jax.experimental.pallas import tpu as pltpu


def bigru_kernel(
    maxlen_ref,  # SMEM (1,)  int32   max(lengths)   (scalar prefetch)
    len_ref,     # (B, 1)     int32   per-batch valid lengths
    gi_ref,      # (T, B, 3H) f32     hoisted input projection for this (direction, time-block)
    h0_ref,      # (B, H)     f32     initial hidden for this direction
    w_hh_ref,    # (H, 3H)    bf16    GRU hidden weights (transposed), gate order [r, z, n]
    bhn_ref,     # (1, H)     f32     hidden bias of the n gate (r/z biases folded into GI)
    out_ref,     # (T, B, H)  f32     per-direction outputs for this time block
    hid_ref,     # (B, H)     f32     per-direction final hidden; doubles as the recurrent carry
):
    d = pl.program_id(0)            # 0 = reverse-time sweep (torch dir 1), 1 = forward (dir 0)
    tb = pl.program_id(1)
    n_tb = pl.num_programs(1)
    t_blk, _, H = out_ref.shape

    @pl.when(tb == 0)
    def _init():                    # first block of each direction: load the initial hidden
        hid_ref[...] = h0_ref[...]

    # Time block actually processed: forward sweep goes 0..n_tb-1, reverse sweep n_tb-1..0.
    block_t = d * tb + (1 - d) * (n_tb - 1 - tb)
    t0 = block_t * t_blk
    all_padding = t0 >= maxlen_ref[0]          # every step in this block is past every length

    @pl.when(all_padding)
    def _skip():                               # pad_packed_sequence: zeros past the lengths
        out_ref[...] = jnp.zeros_like(out_ref)

    @pl.when(jnp.logical_not(all_padding))
    def _compute():
        lengths = len_ref[...]                 # (B, 1)
        w_hh = w_hh_ref[...]                   # (H, 3H) bf16, VMEM-resident for the direction
        b_hn = bhn_ref[...]                    # (1, H)

        def step(s, h_prev):
            # Within-block row: forward sweep visits rows 0..T-1, reverse sweep T-1..0.
            row = d * s + (1 - d) * (t_blk - 1 - s)
            valid = (t0 + row) < lengths       # (B, 1) packed-sequence mask
            gi = gi_ref[row]                   # (B, 3H): x@W_ih + b_ih (+ b_hh for r,z)
            gh = jnp.dot(h_prev.astype(jnp.bfloat16), w_hh,
                         preferred_element_type=jnp.float32)        # (B, 3H), MXU, f32 acc
            r = jax.nn.sigmoid(gi[:, 0:H] + gh[:, 0:H])
            z = jax.nn.sigmoid(gi[:, H:2 * H] + gh[:, H:2 * H])
            n = jnp.tanh(gi[:, 2 * H:] + r * (gh[:, 2 * H:] + b_hn))
            h_cand = n + z * (h_prev - n)      # == (1-z)*n + z*h_prev
            h_new = jnp.where(valid, h_cand, h_prev)   # freeze hidden past the length
            out_ref[row] = jnp.where(valid, h_cand, 0.0)  # zero output past the length
            return h_new

        hid_ref[...] = lax.fori_loop(0, t_blk, step, hid_ref[...], unroll=True)


def _vmem_limit_bytes(t_blk, B, H):
    f32, bf16 = 4, 2
    need = (
        2 * (t_blk * B * 3 * H) * f32      # GI blocks (double-buffered)
        + 2 * (t_blk * B * H) * f32        # output blocks (double-buffered)
        + (H * 3 * H) * bf16               # resident W_hh (single-buffered)
        + 3 * (B * H) * f32                # h0 + hid carry (+ slack)
        + (3 * H + B) * f32                # b_hn, lengths
    )
    return int(min(max(2 * need, 32 * 1024 * 1024), 64 * 1024 * 1024))


def encoder_rnn_forward(input_seqs, input_lengths, params, hidden=None, t_blk=4):
    """input_seqs: (S, B) int32 token ids (seq-major, like PyTorch);
    input_lengths: (B,) int32 (descending, packed-sequence convention);
    hidden: (2, B, H) or None.  Returns (out (S,B,H), h_n (2,B,H))."""
    S, B = input_seqs.shape
    H = params["embedding"].shape[1]
    n_tb = pl.cdiv(S, t_blk)
    S_pad = n_tb * t_blk

    # Embedding gather stays in plain XLA glue; data kept seq-major (no HBM transpose).
    embedded = jnp.take(params["embedding"], input_seqs, axis=0)         # (S, B, H) f32
    if S_pad != S:  # padded tail is masked out in-kernel (time >= lengths), so zeros are fine
        embedded = jnp.pad(embedded, ((0, S_pad - S), (0, 0), (0, 0)))
    if hidden is None:
        hidden = jnp.zeros((2, B, H), jnp.float32)

    lengths = input_lengths.astype(jnp.int32)
    max_len = jnp.max(lengths).reshape(1)                                # scalar prefetch operand
    lengths2d = lengths.reshape(B, 1)

    # bf16 weights (halve HBM traffic / VMEM); matmuls accumulate f32 on the MXU.
    w_ih = params["w_ih_t"].astype(jnp.bfloat16)                         # (2, H, 3H)
    w_hh = params["w_hh_t"].astype(jnp.bfloat16)                         # (2, H, 3H)
    b_ih, b_hh = params["b_ih"], params["b_hh"]                          # (2, 1, 3H)

    # Hoisted input projection: one big GEMM (M = S_pad*B rows per direction) instead of an
    # M=B matmul inside the recurrence.  Fold b_ih fully and b_hh for the r/z gates.
    bias = b_ih.at[:, :, :2 * H].add(b_hh[:, :, :2 * H])                 # (2, 1, 3H)
    gi = jnp.einsum("sbh,dhg->dsbg", embedded.astype(jnp.bfloat16), w_ih,
                    preferred_element_type=jnp.float32) + bias[:, None, :, :]  # (2,S_pad,B,3H) f32
    b_hn = b_hh[:, :, 2 * H:]                                            # (2, 1, H)

    # d = 0 -> reverse sweep (uses PyTorch direction-1 params), d = 1 -> forward (direction 0).
    time_blk = lambda d, tb: d * tb + (1 - d) * (n_tb - 1 - tb)
    dir_blk = lambda d, tb, ml: (1 - d, 0, 0)
    resident = pl.Buffered(1)            # grid-constant blocks: single buffer, no prefetch churn

    grid_spec = pltpu.PrefetchScalarGridSpec(
        num_scalar_prefetch=1,           # max(lengths) -> SMEM, used to skip all-padding blocks
        grid=(2, n_tb),
        in_specs=[
            pl.BlockSpec((B, 1), lambda d, tb, ml: (0, 0), pipeline_mode=resident),   # lengths
            pl.BlockSpec((None, t_blk, B, 3 * H),
                         lambda d, tb, ml: (1 - d, time_blk(d, tb), 0, 0)),           # GI block
            pl.BlockSpec((None, B, H), dir_blk, pipeline_mode=resident),              # h0 per dir
            pl.BlockSpec((None, H, 3 * H), dir_blk, pipeline_mode=resident),          # W_hh per dir
            pl.BlockSpec((None, 1, H), dir_blk, pipeline_mode=resident),              # b_hn per dir
        ],
        out_specs=(
            pl.BlockSpec((None, t_blk, B, H),
                         lambda d, tb, ml: (1 - d, time_blk(d, tb), 0, 0)),           # per-dir out
            pl.BlockSpec((None, B, H), dir_blk),                                      # h_n per dir
        ),
    )

    out_dir, hid = pl.pallas_call(
        bigru_kernel,
        grid_spec=grid_spec,
        out_shape=(
            jax.ShapeDtypeStruct((2, S_pad, B, H), jnp.float32),
            jax.ShapeDtypeStruct((2, B, H), jnp.float32),
        ),
        compiler_params=pltpu.CompilerParams(
            # Directions are now fully independent (no shared scratch) -> "parallel";
            # the time axis carries the recurrence -> "arbitrary".
            dimension_semantics=("parallel", "arbitrary"),
            vmem_limit_bytes=_vmem_limit_bytes(t_blk, B, H),
        ),
    )(max_len, lengths2d, gi, hidden, w_hh, b_hn)

    out = (out_dir[0] + out_dir[1])[:S]      # fwd + bwd sum: cheap mem-bound XLA add
    return out, hid


def reference_forward(input_seqs, input_lengths, params, hidden=None):
    """Pure-JAX reference with identical math (same bf16 matmul casts) for the correctness check."""
    S, B = input_seqs.shape
    H = params["embedding"].shape[1]
    x = jnp.take(params["embedding"], input_seqs, axis=0)                # (S, B, H)
    if hidden is None:
        hidden = jnp.zeros((2, B, H), jnp.float32)
    w_ih = params["w_ih_t"].astype(jnp.bfloat16)
    w_hh = params["w_hh_t"].astype(jnp.bfloat16)
    b_ih, b_hh = params["b_ih"], params["b_hh"]
    lengths = input_lengths.astype(jnp.int32)

    def cell(xt, h, dd):
        gi = jnp.dot(xt.astype(jnp.bfloat16), w_ih[dd], preferred_element_type=jnp.float32) + b_ih[dd]
        gh = jnp.dot(h.astype(jnp.bfloat16), w_hh[dd], preferred_element_type=jnp.float32) + b_hh[dd]
        r = jax.nn.sigmoid(gi[:, :H] + gh[:, :H])
        z = jax.nn.sigmoid(gi[:, H:2 * H] + gh[:, H:2 * H])
        n = jnp.tanh(gi[:, 2 * H:] + r * gh[:, 2 * H:])
        return (1.0 - z) * n + z * h

    # Forward direction (PyTorch dir 0)
    h = hidden[0]
    outs_f = []
    for t in range(S):
        c = cell(x[t], h, 0)
        m = (t < lengths)[:, None]
        h = jnp.where(m, c, h)
        outs_f.append(jnp.where(m, c, 0.0))
    h_f = h
    # Reverse direction (PyTorch dir 1): effectively starts at lengths[b]-1 per batch element
    h = hidden[1]
    outs_b = [None] * S
    for t in range(S - 1, -1, -1):
        c = cell(x[t], h, 1)
        m = (t < lengths)[:, None]
        h = jnp.where(m, c, h)
        outs_b[t] = jnp.where(m, c, 0.0)
    h_b = h

    out = jnp.stack(outs_f, axis=0) + jnp.stack(outs_b, axis=0)
    hid = jnp.stack([h_f, h_b], axis=0)
    return out, hid


def init_params(key, input_size, hidden_size):
    V, H = input_size, hidden_size
    ks = jax.random.split(key, 5)
    s = 0.1
    return {
        "embedding": jax.random.normal(ks[0], (V, H), jnp.float32) * s,
        # PyTorch weight_ih_l0 / _reverse are (3H, H); stored transposed + stacked as (2, H, 3H)
        "w_ih_t": jax.random.normal(ks[1], (2, H, 3 * H), jnp.float32) * s,
        "w_hh_t": jax.random.normal(ks[2], (2, H, 3 * H), jnp.float32) * s,
        "b_ih": jax.random.normal(ks[3], (2, 1, 3 * H), jnp.float32) * s,
        "b_hh": jax.random.normal(ks[4], (2, 1, 3 * H), jnp.float32) * s,
    }


if __name__ == "__main__":
    # Small demo shapes: S chosen so the time axis gets padded (10 -> 12 with T_BLK=4) and the
    # last time block is entirely padding (max length 7 < 8) -> exercises the skip path, the
    # partial-length masking, and the padded-tail truncation.
    S, B, H, V = 10, 2, 32, 16   # src seq len, batch, hidden_size, input_size (vocab)

    root = jax.random.PRNGKey(0)
    k_par, k_seq = jax.random.split(root, 2)

    params = init_params(k_par, V, H)
    input_seqs = jax.random.randint(k_seq, (S, B), 0, V, dtype=jnp.int32)   # (S, B)
    input_lengths = jnp.array([7, 4], dtype=jnp.int32)                      # descending (packed req.)

    output, hidden = encoder_rnn_forward(input_seqs, input_lengths, params)
    jax.block_until_ready((output, hidden))

    # Correctness check vs pure-JAX reference (identical bf16-matmul math).
    r_out, r_hid = reference_forward(input_seqs, input_lengths, params)
    assert output.shape == (S, B, H) and hidden.shape == (2, B, H)
    assert jnp.allclose(output, r_out, atol=2e-3), float(jnp.max(jnp.abs(output - r_out)))
    assert jnp.allclose(hidden, r_hid, atol=2e-3), float(jnp.max(jnp.abs(hidden - r_hid)))

    print("KERNEL_OK")
</pallas_src>

<mosaic_0001>
module attributes {stable_mosaic.version = 11 : i64} {
  func.func @bigru_kernel(%arg0: i32, %arg1: i32, %arg2: memref<1xi32, #tpu.memory_space<smem>>, %arg3: memref<2x1xi32, #tpu.memory_space<vmem>>, %arg4: memref<1x4x2x96xf32, #tpu.memory_space<vmem>>, %arg5: memref<1x2x32xf32, #tpu.memory_space<vmem>>, %arg6: memref<1x32x96xbf16, #tpu.memory_space<vmem>>, %arg7: memref<1x1x32xf32, #tpu.memory_space<vmem>>, %arg8: memref<1x4x2x32xf32, #tpu.memory_space<vmem>>, %arg9: memref<1x2x32xf32, #tpu.memory_space<vmem>>) attributes {dimension_semantics = [#tpu.dimension_semantics<parallel>, #tpu.dimension_semantics<arbitrary>], iteration_bounds = array<i64: 2, 3>, scalar_prefetch = 1 : i64, scratch_operands = 0 : i64, tpu.core_type = #tpu.core_type<tc>, window_params = [{pipeline_mode = #tpu.pipeline_mode<synchronous>, transform_indices = @transform_0, window_bounds = array<i64: 2, 1>}, {transform_indices = @transform_1, window_bounds = array<i64: 1, 4, 2, 96>}, {pipeline_mode = #tpu.pipeline_mode<synchronous>, transform_indices = @transform_2, window_bounds = array<i64: 1, 2, 32>}, {pipeline_mode = #tpu.pipeline_mode<synchronous>, transform_indices = @transform_3, window_bounds = array<i64: 1, 32, 96>}, {pipeline_mode = #tpu.pipeline_mode<synchronous>, transform_indices = @transform_4, window_bounds = array<i64: 1, 1, 32>}, {transform_indices = @transform_5, window_bounds = array<i64: 1, 4, 2, 32>}, {transform_indices = @transform_6, window_bounds = array<i64: 1, 2, 32>}]} {
    %c0_i32 = arith.constant 0 : i32
    %0 = arith.cmpi eq, %arg1, %c0_i32 : i32
    %1 = arith.extui %0 : i1 to i32
    %c0_i32_0 = arith.constant 0 : i32
    %2 = arith.cmpi ne, %1, %c0_i32_0 : i32
    scf.if %2 {
      %c0_3 = arith.constant 0 : index
      %c0_4 = arith.constant 0 : index
      %c0_5 = arith.constant 0 : index
      %16 = vector.load %arg5[%c0_3, %c0_4, %c0_5] : memref<1x2x32xf32, #tpu.memory_space<vmem>>, vector<1x2x32xf32>
      %17 = vector.shape_cast %16 : vector<1x2x32xf32> to vector<2x32xf32>
      %c0_6 = arith.constant 0 : index
      %c0_7 = arith.constant 0 : index
      %c0_8 = arith.constant 0 : index
      %18 = vector.load %arg9[%c0_6, %c0_7, %c0_8] : memref<1x2x32xf32, #tpu.memory_space<vmem>>, vector<1x2x32xf32>
      %19 = vector.shape_cast %18 : vector<1x2x32xf32> to vector<2x32xf32>
      %20 = vector.shape_cast %17 : vector<2x32xf32> to vector<1x2x32xf32>
      tpu.vector_store %arg9[%c0_6, %c0_7, %c0_8], %20 {strides = array<i32>} : memref<1x2x32xf32, #tpu.memory_space<vmem>>, vector<1x2x32xf32>,
    } else {
    }
    %3 = arith.muli %arg0, %arg1 : i32
    %c1_i32 = arith.constant 1 : i32
    %4 = arith.subi %c1_i32, %arg0 : i32
    %c2_i32 = arith.constant 2 : i32
    %5 = arith.subi %c2_i32, %arg1 : i32
    %6 = arith.muli %4, %5 : i32
    %7 = arith.addi %3, %6 : i32
    %c4_i32 = arith.constant 4 : i32
    %8 = arith.muli %7, %c4_i32 : i32
    %c0 = arith.constant 0 : index
    %9 = memref.load %arg2[%c0] : memref<1xi32, #tpu.memory_space<smem>>
    %10 = arith.cmpi sge, %8, %9 : i32
    %11 = arith.extui %10 : i1 to i32
    %c0_i32_1 = arith.constant 0 : i32
    %12 = arith.cmpi ne, %11, %c0_i32_1 : i32
    scf.if %12 {
      %cst = arith.constant 0.000000e+00 : f32
      %16 = vector.broadcast %cst : f32 to vector<4x2x32xf32>
      %c0_3 = arith.constant 0 : index
      %c0_4 = arith.constant 0 : index
      %c0_5 = arith.constant 0 : index
      %c0_6 = arith.constant 0 : index
      %17 = vector.load %arg8[%c0_3, %c0_4, %c0_5, %c0_6] : memref<1x4x2x32xf32, #tpu.memory_space<vmem>>, vector<1x4x2x32xf32>
      %18 = vector.shape_cast %17 : vector<1x4x2x32xf32> to vector<4x2x32xf32>
      %19 = vector.shape_cast %16 : vector<4x2x32xf32> to vector<1x4x2x32xf32>
      tpu.vector_store %arg8[%c0_3, %c0_4, %c0_5, %c0_6], %19 {strides = array<i32>} : memref<1x4x2x32xf32, #tpu.memory_space<vmem>>, vector<1x4x2x32xf32>,
    } else {
    }
    %true = arith.constant true
    %13 = arith.xori %10, %true : i1
    %14 = arith.extui %13 : i1 to i32
    %c0_i32_2 = arith.constant 0 : i32
    %15 = arith.cmpi ne, %14, %c0_i32_2 : i32
    scf.if %15 {
      %c0_3 = arith.constant 0 : index
      %c0_4 = arith.constant 0 : index
      %16 = vector.load %arg3[%c0_3, %c0_4] : memref<2x1xi32, #tpu.memory_space<vmem>>, vector<2x1xi32>
      %c0_5 = arith.constant 0 : index
      %c0_6 = arith.constant 0 : index
      %c0_7 = arith.constant 0 : index
      %17 = vector.load %arg6[%c0_5, %c0_6, %c0_7] : memref<1x32x96xbf16, #tpu.memory_space<vmem>>, vector<1x32x96xbf16>
      %18 = vector.shape_cast %17 : vector<1x32x96xbf16> to vector<32x96xbf16>
      %c0_8 = arith.constant 0 : index
      %c0_9 = arith.constant 0 : index
      %c0_10 = arith.constant 0 : index
      %19 = vector.load %arg7[%c0_8, %c0_9, %c0_10] : memref<1x1x32xf32, #tpu.memory_space<vmem>>, vector<1x1x32xf32>
      %20 = vector.shape_cast %19 : vector<1x1x32xf32> to vector<1x32xf32>
      %c0_11 = arith.constant 0 : index
      %c0_12 = arith.constant 0 : index
      %c0_13 = arith.constant 0 : index
      %21 = vector.load %arg9[%c0_11, %c0_12, %c0_13] : memref<1x2x32xf32, #tpu.memory_space<vmem>>, vector<1x2x32xf32>
      %22 = vector.shape_cast %21 : vector<1x2x32xf32> to vector<2x32xf32>
      %c0_i32_14 = arith.constant 0 : i32
      %23 = arith.muli %arg0, %c0_i32_14 : i32
      %c1_i32_15 = arith.constant 1 : i32
      %24 = arith.subi %c1_i32_15, %arg0 : i32
      %c3_i32 = arith.constant 3 : i32
      %25 = arith.subi %c3_i32, %c0_i32_14 : i32
      %26 = arith.muli %24, %25 : i32
      %27 = arith.addi %23, %26 : i32
      %28 = arith.addi %8, %27 : i32
      %29 = vector.broadcast %28 : i32 to vector<2x1xi32>
      %30 = arith.cmpi slt, %29, %16 : vector<2x1xi32>
      %c0_16 = arith.constant 0 : index
      %31 = arith.index_cast %27 : i32 to index
      %c0_17 = arith.constant 0 : index
      %c0_18 = arith.constant 0 : index
      %32 = vector.load %arg4[%c0_16, %31, %c0_17, %c0_18] : memref<1x4x2x96xf32, #tpu.memory_space<vmem>>, vector<1x1x2x96xf32>
      %33 = vector.shape_cast %32 : vector<1x1x2x96xf32> to vector<2x96xf32>
      %34 = arith.truncf %22 : vector<2x32xf32> to vector<2x32xbf16>
      %cst = arith.constant dense<0.000000e+00> : vector<2x96xf32>
      %35 = tpu.matmul %34, %18, %cst {dimension_numbers = #tpu.dot_dimension_numbers<[1], [0], [0], [1], [0, 0, 1, 1], [], []>} : vector<2x32xbf16>, vector<32x96xbf16>, vector<2x96xf32> -> vector<2x96xf32>
      %36 = vector.extract_strided_slice %33 {offsets = [0, 0], sizes = [2, 32], strides = [1, 1]} : vector<2x96xf32> to vector<2x32xf32>
      %37 = vector.extract_strided_slice %35 {offsets = [0, 0], sizes = [2, 32], strides = [1, 1]} : vector<2x96xf32> to vector<2x32xf32>
      %38 = arith.addf %36, %37 : vector<2x32xf32>
      %39 = arith.negf %38 : vector<2x32xf32>
      %40 = math.exp %39 : vector<2x32xf32>
      %cst_19 = arith.constant 1.000000e+00 : f32
      %41 = vector.broadcast %cst_19 : f32 to vector<2x32xf32>
      %42 = arith.addf %41, %40 : vector<2x32xf32>
      %43 = arith.divf %41, %42 : vector<2x32xf32>
      %44 = vector.extract_strided_slice %33 {offsets = [0, 32], sizes = [2, 32], strides = [1, 1]} : vector<2x96xf32> to vector<2x32xf32>
      %45 = vector.extract_strided_slice %35 {offsets = [0, 32], sizes = [2, 32], strides = [1, 1]} : vector<2x96xf32> to vector<2x32xf32>
      %46 = arith.addf %44, %45 : vector<2x32xf32>
      %47 = arith.negf %46 : vector<2x32xf32>
      %48 = math.exp %47 : vector<2x32xf32>
      %cst_20 = arith.constant 1.000000e+00 : f32
      %49 = vector.broadcast %cst_20 : f32 to vector<2x32xf32>
      %50 = arith.addf %49, %48 : vector<2x32xf32>
      %51 = arith.divf %49, %50 : vector<2x32xf32>
      %52 = vector.extract_strided_slice %33 {offsets = [0, 64], sizes = [2, 32], strides = [1, 1]} : vector<2x96xf32> to vector<2x32xf32>
      %53 = vector.extract_strided_slice %35 {offsets = [0, 64], sizes = [2, 32], strides = [1, 1]} : vector<2x96xf32> to vector<2x32xf32>
      %54 = vector.broadcast %20 : vector<1x32xf32> to vector<2x32xf32>
      %55 = arith.addf %53, %54 : vector<2x32xf32>
      %56 = arith.mulf %43, %55 : vector<2x32xf32>
      %57 = arith.addf %52, %56 : vector<2x32xf32>
      %58 = math.tanh %57 : vector<2x32xf32>
      %59 = arith.subf %22, %58 : vector<2x32xf32>
      %60 = arith.mulf %51, %59 : vector<2x32xf32>
      %61 = arith.addf %58, %60 : vector<2x32xf32>
      %62 = vector.shape_cast %30 : vector<2x1xi1> to vector<2x1xi1>
      %63 = vector.broadcast %62 : vector<2x1xi1> to vector<2x32xi1>
      %64 = arith.select %63, %61, %22 : vector<2x32xi1>, vector<2x32xf32>
      %cst_21 = arith.constant 0.000000e+00 : f32
      %65 = vector.shape_cast %30 : vector<2x1xi1> to vector<2x1xi1>
      %66 = vector.broadcast %65 : vector<2x1xi1> to vector<2x32xi1>
      %67 = vector.broadcast %cst_21 : f32 to vector<2x32xf32>
      %68 = arith.select %66, %61, %67 : vector<2x32xi1>, vector<2x32xf32>
      %c0_22 = arith.constant 0 : index
      %69 = arith.index_cast %27 : i32 to index
      %c0_23 = arith.constant 0 : index
      %c0_24 = arith.constant 0 : index
      %70 = vector.load %arg8[%c0_22, %69, %c0_23, %c0_24] : memref<1x4x2x32xf32, #tpu.memory_space<vmem>>, vector<1x1x2x32xf32>
      %71 = vector.shape_cast %70 : vector<1x1x2x32xf32> to vector<2x32xf32>
      %72 = vector.shape_cast %68 : vector<2x32xf32> to vector<1x1x2x32xf32>
      tpu.vector_store %arg8[%c0_22, %69, %c0_23, %c0_24], %72 {strides = array<i32>} : memref<1x4x2x32xf32, #tpu.memory_space<vmem>>, vector<1x1x2x32xf32>,
      %c1_i32_25 = arith.constant 1 : i32
      %73 = arith.muli %arg0, %c1_i32_25 : i32
      %c1_i32_26 = arith.constant 1 : i32
      %74 = arith.subi %c1_i32_26, %arg0 : i32
      %c3_i32_27 = arith.constant 3 : i32
      %75 = arith.subi %c3_i32_27, %c1_i32_25 : i32
      %76 = arith.muli %74, %75 : i32
      %77 = arith.addi %73, %76 : i32
      %78 = arith.addi %8, %77 : i32
      %79 = vector.broadcast %78 : i32 to vector<2x1xi32>
      %80 = arith.cmpi slt, %79, %16 : vector<2x1xi32>
      %c0_28 = arith.constant 0 : index
      %81 = arith.index_cast %77 : i32 to index
      %c0_29 = arith.constant 0 : index
      %c0_30 = arith.constant 0 : index
      %82 = vector.load %arg4[%c0_28, %81, %c0_29, %c0_30] : memref<1x4x2x96xf32, #tpu.memory_space<vmem>>, vector<1x1x2x96xf32>
      %83 = vector.shape_cast %82 : vector<1x1x2x96xf32> to vector<2x96xf32>
      %84 = arith.truncf %64 : vector<2x32xf32> to vector<2x32xbf16>
      %cst_31 = arith.constant dense<0.000000e+00> : vector<2x96xf32>
      %85 = tpu.matmul %84, %18, %cst_31 {dimension_numbers = #tpu.dot_dimension_numbers<[1], [0], [0], [1], [0, 0, 1, 1], [], []>} : vector<2x32xbf16>, vector<32x96xbf16>, vector<2x96xf32> -> vector<2x96xf32>
      %86 = vector.extract_strided_slice %83 {offsets = [0, 0], sizes = [2, 32], strides = [1, 1]} : vector<2x96xf32> to vector<2x32xf32>
      %87 = vector.extract_strided_slice %85 {offsets = [0, 0], sizes = [2, 32], strides = [1, 1]} : vector<2x96xf32> to vector<2x32xf32>
      %88 = arith.addf %86, %87 : vector<2x32xf32>
      %89 = arith.negf %88 : vector<2x32xf32>
      %90 = math.exp %89 : vector<2x32xf32>
      %cst_32 = arith.constant 1.000000e+00 : f32
      %91 = vector.broadcast %cst_32 : f32 to vector<2x32xf32>
      %92 = arith.addf %91, %90 : vector<2x32xf32>
      %93 = arith.divf %91, %92 : vector<2x32xf32>
      %94 = vector.extract_strided_slice %83 {offsets = [0, 32], sizes = [2, 32], strides = [1, 1]} : vector<2x96xf32> to vector<2x32xf32>
      %95 = vector.extract_strided_slice %85 {offsets = [0, 32], sizes = [2, 32], strides = [1, 1]} : vector<2x96xf32> to vector<2x32xf32>
      %96 = arith.addf %94, %95 : vector<2x32xf32>
      %97 = arith.negf %96 : vector<2x32xf32>
      %98 = math.exp %97 : vector<2x32xf32>
      %cst_33 = arith.constant 1.000000e+00 : f32
      %99 = vector.broadcast %cst_33 : f32 to vector<2x32xf32>
      %100 = arith.addf %99, %98 : vector<2x32xf32>
      %101 = arith.divf %99, %100 : vector<2x32xf32>
      %102 = vector.extract_strided_slice %83 {offsets = [0, 64], sizes = [2, 32], strides = [1, 1]} : vector<2x96xf32> to vector<2x32xf32>
      %103 = vector.extract_strided_slice %85 {offsets = [0, 64], sizes = [2, 32], strides = [1, 1]} : vector<2x96xf32> to vector<2x32xf32>
      %104 = vector.broadcast %20 : vector<1x32xf32> to vector<2x32xf32>
      %105 = arith.addf %103, %104 : vector<2x32xf32>
      %106 = arith.mulf %93, %105 : vector<2x32xf32>
      %107 = arith.addf %102, %106 : vector<2x32xf32>
      %108 = math.tanh %107 : vector<2x32xf32>
      %109 = arith.subf %64, %108 : vector<2x32xf32>
      %110 = arith.mulf %101, %109 : vector<2x32xf32>
      %111 = arith.addf %108, %110 : vector<2x32xf32>
      %112 = vector.shape_cast %80 : vector<2x1xi1> to vector<2x1xi1>
      %113 = vector.broadcast %112 : vector<2x1xi1> to vector<2x32xi1>
      %114 = arith.select %113, %111, %64 : vector<2x32xi1>, vector<2x32xf32>
      %cst_34 = arith.constant 0.000000e+00 : f32
      %115 = vector.shape_cast %80 : vector<2x1xi1> to vector<2x1xi1>
      %116 = vector.broadcast %115 : vector<2x1xi1> to vector<2x32xi1>
      %117 = vector.broadcast %cst_34 : f32 to vector<2x32xf32>
      %118 = arith.select %116, %111, %117 : vector<2x32xi1>, vector<2x32xf32>
      %c0_35 = arith.constant 0 : index
      %119 = arith.index_cast %77 : i32 to index
      %c0_36 = arith.constant 0 : index
      %c0_37 = arith.constant 0 : index
      %120 = vector.load %arg8[%c0_35, %119, %c0_36, %c0_37] : memref<1x4x2x32xf32, #tpu.memory_space<vmem>>, vector<1x1x2x32xf32>
      %121 = vector.shape_cast %120 : vector<1x1x2x32xf32> to vector<2x32xf32>
      %122 = vector.shape_cast %118 : vector<2x32xf32> to vector<1x1x2x32xf32>
      tpu.vector_store %arg8[%c0_35, %119, %c0_36, %c0_37], %122 {strides = array<i32>} : memref<1x4x2x32xf32, #tpu.memory_space<vmem>>, vector<1x1x2x32xf32>,
      %c2_i32_38 = arith.constant 2 : i32
      %123 = arith.muli %arg0, %c2_i32_38 : i32
      %c1_i32_39 = arith.constant 1 : i32
      %124 = arith.subi %c1_i32_39, %arg0 : i32
      %c3_i32_40 = arith.constant 3 : i32
      %125 = arith.subi %c3_i32_40, %c2_i32_38 : i32
      %126 = arith.muli %124, %125 : i32
      %127 = arith.addi %123, %126 : i32
      %128 = arith.addi %8, %127 : i32
      %129 = vector.broadcast %128 : i32 to vector<2x1xi32>
      %130 = arith.cmpi slt, %129, %16 : vector<2x1xi32>
      %c0_41 = arith.constant 0 : index
      %131 = arith.index_cast %127 : i32 to index
      %c0_42 = arith.constant 0 : index
      %c0_43 = arith.constant 0 : index
      %132 = vector.load %arg4[%c0_41, %131, %c0_42, %c0_43] : memref<1x4x2x96xf32, #tpu.memory_space<vmem>>, vector<1x1x2x96xf32>
      %133 = vector.shape_cast %132 : vector<1x1x2x96xf32> to vector<2x96xf32>
      %134 = arith.truncf %114 : vector<2x32xf32> to vector<2x32xbf16>
      %cst_44 = arith.constant dense<0.000000e+00> : vector<2x96xf32>
      %135 = tpu.matmul %134, %18, %cst_44 {dimension_numbers = #tpu.dot_dimension_numbers<[1], [0], [0], [1], [0, 0, 1, 1], [], []>} : vector<2x32xbf16>, vector<32x96xbf16>, vector<2x96xf32> -> vector<2x96xf32>
      %136 = vector.extract_strided_slice %133 {offsets = [0, 0], sizes = [2, 32], strides = [1, 1]} : vector<2x96xf32> to vector<2x32xf32>
      %137 = vector.extract_strided_slice %135 {offsets = [0, 0], sizes = [2, 32], strides = [1, 1]} : vector<2x96xf32> to vector<2x32xf32>
      %138 = arith.addf %136, %137 : vector<2x32xf32>
      %139 = arith.negf %138 : vector<2x32xf32>
      %140 = math.exp %139 : vector<2x32xf32>
      %cst_45 = arith.constant 1.000000e+00 : f32
      %141 = vector.broadcast %cst_45 : f32 to vector<2x32xf32>
      %142 = arith.addf %141, %140 : vector<2x32xf32>
      %143 = arith.divf %141, %142 : vector<2x32xf32>
      %144 = vector.extract_strided_slice %133 {offsets = [0, 32], sizes = [2, 32], strides = [1, 1]} : vector<2x96xf32> to vector<2x32xf32>
      %145 = vector.extract_strided_slice %135 {offsets = [0, 32], sizes = [2, 32], strides = [1, 1]} : vector<2x96xf32> to vector<2x32xf32>
      %146 = arith.addf %144, %145 : vector<2x32xf32>
      %147 = arith.negf %146 : vector<2x32xf32>
      %148 = math.exp %147 : vector<2x32xf32>
      %cst_46 = arith.constant 1.000000e+00 : f32
      %149 = vector.broadcast %cst_46 : f32 to vector<2x32xf32>
      %150 = arith.addf %149, %148 : vector<2x32xf32>
      %151 = arith.divf %149, %150 : vector<2x32xf32>
      %152 = vector.extract_strided_slice %133 {offsets = [0, 64], sizes = [2, 32], strides = [1, 1]} : vector<2x96xf32> to vector<2x32xf32>
      %153 = vector.extract_strided_slice %135 {offsets = [0, 64], sizes = [2, 32], strides = [1, 1]} : vector<2x96xf32> to vector<2x32xf32>
      %154 = vector.broadcast %20 : vector<1x32xf32> to vector<2x32xf32>
      %155 = arith.addf %153, %154 : vector<2x32xf32>
      %156 = arith.mulf %143, %155 : vector<2x32xf32>
      %157 = arith.addf %152, %156 : vector<2x32xf32>
      %158 = math.tanh %157 : vector<2x32xf32>
      %159 = arith.subf %114, %158 : vector<2x32xf32>
      %160 = arith.mulf %151, %159 : vector<2x32xf32>
      %161 = arith.addf %158, %160 : vector<2x32xf32>
      %162 = vector.shape_cast %130 : vector<2x1xi1> to vector<2x1xi1>
      %163 = vector.broadcast %162 : vector<2x1xi1> to vector<2x32xi1>
      %164 = arith.select %163, %161, %114 : vector<2x32xi1>, vector<2x32xf32>
      %cst_47 = arith.constant 0.000000e+00 : f32
      %165 = vector.shape_cast %130 : vector<2x1xi1> to vector<2x1xi1>
      %166 = vector.broadcast %165 : vector<2x1xi1> to vector<2x32xi1>
      %167 = vector.broadcast %cst_47 : f32 to vector<2x32xf32>
      %168 = arith.select %166, %161, %167 : vector<2x32xi1>, vector<2x32xf32>
      %c0_48 = arith.constant 0 : index
      %169 = arith.index_cast %127 : i32 to index
      %c0_49 = arith.constant 0 : index
      %c0_50 = arith.constant 0 : index
      %170 = vector.load %arg8[%c0_48, %169, %c0_49, %c0_50] : memref<1x4x2x32xf32, #tpu.memory_space<vmem>>, vector<1x1x2x32xf32>
      %171 = vector.shape_cast %170 : vector<1x1x2x32xf32> to vector<2x32xf32>
      %172 = vector.shape_cast %168 : vector<2x32xf32> to vector<1x1x2x32xf32>
      tpu.vector_store %arg8[%c0_48, %169, %c0_49, %c0_50], %172 {strides = array<i32>} : memref<1x4x2x32xf32, #tpu.memory_space<vmem>>, vector<1x1x2x32xf32>,
      %c3_i32_51 = arith.constant 3 : i32
      %173 = arith.muli %arg0, %c3_i32_51 : i32
      %c1_i32_52 = arith.constant 1 : i32
      %174 = arith.subi %c1_i32_52, %arg0 : i32
      %c3_i32_53 = arith.constant 3 : i32
      %175 = arith.subi %c3_i32_53, %c3_i32_51 : i32
      %176 = arith.muli %174, %175 : i32
      %177 = arith.addi %173, %176 : i32
      %178 = arith.addi %8, %177 : i32
      %179 = vector.broadcast %178 : i32 to vector<2x1xi32>
      %180 = arith.cmpi slt, %179, %16 : vector<2x1xi32>
      %c0_54 = arith.constant 0 : index
      %181 = arith.index_cast %177 : i32 to index
      %c0_55 = arith.constant 0 : index
      %c0_56 = arith.constant 0 : index
      %182 = vector.load %arg4[%c0_54, %181, %c0_55, %c0_56] : memref<1x4x2x96xf32, #tpu.memory_space<vmem>>, vector<1x1x2x96xf32>
      %183 = vector.shape_cast %182 : vector<1x1x2x96xf32> to vector<2x96xf32>
      %184 = arith.truncf %164 : vector<2x32xf32> to vector<2x32xbf16>
      %cst_57 = arith.constant dense<0.000000e+00> : vector<2x96xf32>
      %185 = tpu.matmul %184, %18, %cst_57 {dimension_numbers = #tpu.dot_dimension_numbers<[1], [0], [0], [1], [0, 0, 1, 1], [], []>} : vector<2x32xbf16>, vector<32x96xbf16>, vector<2x96xf32> -> vector<2x96xf32>
      %186 = vector.extract_strided_slice %183 {offsets = [0, 0], sizes = [2, 32], strides = [1, 1]} : vector<2x96xf32> to vector<2x32xf32>
      %187 = vector.extract_strided_slice %185 {offsets = [0, 0], sizes = [2, 32], strides = [1, 1]} : vector<2x96xf32> to vector<2x32xf32>
      %188 = arith.addf %186, %187 : vector<2x32xf32>
      %189 = arith.negf %188 : vector<2x32xf32>
      %190 = math.exp %189 : vector<2x32xf32>
      %cst_58 = arith.constant 1.000000e+00 : f32
      %191 = vector.broadcast %cst_58 : f32 to vector<2x32xf32>
      %192 = arith.addf %191, %190 : vector<2x32xf32>
      %193 = arith.divf %191, %192 : vector<2x32xf32>
      %194 = vector.extract_strided_slice %183 {offsets = [0, 32], sizes = [2, 32], strides = [1, 1]} : vector<2x96xf32> to vector<2x32xf32>
      %195 = vector.extract_strided_slice %185 {offsets = [0, 32], sizes = [2, 32], strides = [1, 1]} : vector<2x96xf32> to vector<2x32xf32>
      %196 = arith.addf %194, %195 : vector<2x32xf32>
      %197 = arith.negf %196 : vector<2x32xf32>
      %198 = math.exp %197 : vector<2x32xf32>
      %cst_59 = arith.constant 1.000000e+00 : f32
      %199 = vector.broadcast %cst_59 : f32 to vector<2x32xf32>
      %200 = arith.addf %199, %198 : vector<2x32xf32>
      %201 = arith.divf %199, %200 : vector<2x32xf32>
      %202 = vector.extract_strided_slice %183 {offsets = [0, 64], sizes = [2, 32], strides = [1, 1]} : vector<2x96xf32> to vector<2x32xf32>
      %203 = vector.extract_strided_slice %185 {offsets = [0, 64], sizes = [2, 32], strides = [1, 1]} : vector<2x96xf32> to vector<2x32xf32>
      %204 = vector.broadcast %20 : vector<1x32xf32> to vector<2x32xf32>
      %205 = arith.addf %203, %204 : vector<2x32xf32>
      %206 = arith.mulf %193, %205 : vector<2x32xf32>
      %207 = arith.addf %202, %206 : vector<2x32xf32>
      %208 = math.tanh %207 : vector<2x32xf32>
      %209 = arith.subf %164, %208 : vector<2x32xf32>
      %210 = arith.mulf %201, %209 : vector<2x32xf32>
      %211 = arith.addf %208, %210 : vector<2x32xf32>
      %212 = vector.shape_cast %180 : vector<2x1xi1> to vector<2x1xi1>
      %213 = vector.broadcast %212 : vector<2x1xi1> to vector<2x32xi1>
      %214 = arith.select %213, %211, %164 : vector<2x32xi1>, vector<2x32xf32>
      %cst_60 = arith.constant 0.000000e+00 : f32
      %215 = vector.shape_cast %180 : vector<2x1xi1> to vector<2x1xi1>
      %216 = vector.broadcast %215 : vector<2x1xi1> to vector<2x32xi1>
      %217 = vector.broadcast %cst_60 : f32 to vector<2x32xf32>
      %218 = arith.select %216, %211, %217 : vector<2x32xi1>, vector<2x32xf32>
      %c0_61 = arith.constant 0 : index
      %219 = arith.index_cast %177 : i32 to index
      %c0_62 = arith.constant 0 : index
      %c0_63 = arith.constant 0 : index
      %220 = vector.load %arg8[%c0_61, %219, %c0_62, %c0_63] : memref<1x4x2x32xf32, #tpu.memory_space<vmem>>, vector<1x1x2x32xf32>
      %221 = vector.shape_cast %220 : vector<1x1x2x32xf32> to vector<2x32xf32>
      %222 = vector.shape_cast %218 : vector<2x32xf32> to vector<1x1x2x32xf32>
      tpu.vector_store %arg8[%c0_61, %219, %c0_62, %c0_63], %222 {strides = array<i32>} : memref<1x4x2x32xf32, #tpu.memory_space<vmem>>, vector<1x1x2x32xf32>,
      %c4_i32_64 = arith.constant 4 : i32
      %c0_65 = arith.constant 0 : index
      %c0_66 = arith.constant 0 : index
      %c0_67 = arith.constant 0 : index
      %223 = vector.load %arg9[%c0_65, %c0_66, %c0_67] : memref<1x2x32xf32, #tpu.memory_space<vmem>>, vector<1x2x32xf32>
      %224 = vector.shape_cast %223 : vector<1x2x32xf32> to vector<2x32xf32>
      %225 = vector.shape_cast %214 : vector<2x32xf32> to vector<1x2x32xf32>
      tpu.vector_store %arg9[%c0_65, %c0_66, %c0_67], %225 {strides = array<i32>} : memref<1x2x32xf32, #tpu.memory_space<vmem>>, vector<1x2x32xf32>,
    } else {
    }
    return
  }
  func.func @transform_0(%arg0: i32, %arg1: i32, %arg2: memref<1xi32, #tpu.memory_space<smem>>) -> (i32, i32) {
    %c0_i32 = arith.constant 0 : i32
    %c0_i32_0 = arith.constant 0 : i32
    %c0_i32_1 = arith.constant 0 : i32
    return %c0_i32, %c0_i32_0 : i32, i32
  }
  func.func @transform_1(%arg0: i32, %arg1: i32, %arg2: memref<1xi32, #tpu.memory_space<smem>>) -> (i32, i32, i32, i32) {
    %c1_i32 = arith.constant 1 : i32
    %0 = arith.subi %c1_i32, %arg0 : i32
    %1 = arith.muli %arg0, %arg1 : i32
    %c1_i32_0 = arith.constant 1 : i32
    %2 = arith.subi %c1_i32_0, %arg0 : i32
    %c2_i32 = arith.constant 2 : i32
    %3 = arith.subi %c2_i32, %arg1 : i32
    %4 = arith.muli %2, %3 : i32
    %5 = arith.addi %1, %4 : i32
    %c0_i32 = arith.constant 0 : i32
    %c0_i32_1 = arith.constant 0 : i32
    %c0_i32_2 = arith.constant 0 : i32
    return %0, %5, %c0_i32, %c0_i32_1 : i32, i32, i32, i32
  }
  func.func @transform_2(%arg0: i32, %arg1: i32, %arg2: memref<1xi32, #tpu.memory_space<smem>>) -> (i32, i32, i32) {
    %c1_i32 = arith.constant 1 : i32
    %0 = arith.subi %c1_i32, %arg0 : i32
    %c0_i32 = arith.constant 0 : i32
    %c0_i32_0 = arith.constant 0 : i32
    %c0_i32_1 = arith.constant 0 : i32
    return %0, %c0_i32, %c0_i32_0 : i32, i32, i32
  }
  func.func @transform_3(%arg0: i32, %arg1: i32, %arg2: memref<1xi32, #tpu.memory_space<smem>>) -> (i32, i32, i32) {
    %c1_i32 = arith.constant 1 : i32
    %0 = arith.subi %c1_i32, %arg0 : i32
    %c0_i32 = arith.constant 0 : i32
    %c0_i32_0 = arith.constant 0 : i32
    %c0_i32_1 = arith.constant 0 : i32
    return %0, %c0_i32, %c0_i32_0 : i32, i32, i32
  }
  func.func @transform_4(%arg0: i32, %arg1: i32, %arg2: memref<1xi32, #tpu.memory_space<smem>>) -> (i32, i32, i32) {
    %c1_i32 = arith.constant 1 : i32
    %0 = arith.subi %c1_i32, %arg0 : i32
    %c0_i32 = arith.constant 0 : i32
    %c0_i32_0 = arith.constant 0 : i32
    %c0_i32_1 = arith.constant 0 : i32
    return %0, %c0_i32, %c0_i32_0 : i32, i32, i32
  }
  func.func @transform_5(%arg0: i32, %arg1: i32, %arg2: memref<1xi32, #tpu.memory_space<smem>>) -> (i32, i32, i32, i32) {
    %c1_i32 = arith.constant 1 : i32
    %0 = arith.subi %c1_i32, %arg0 : i32
    %1 = arith.muli %arg0, %arg1 : i32
    %c1_i32_0 = arith.constant 1 : i32
    %2 = arith.subi %c1_i32_0, %arg0 : i32
    %c2_i32 = arith.constant 2 : i32
    %3 = arith.subi %c2_i32, %arg1 : i32
    %4 = arith.muli %2, %3 : i32
    %5 = arith.addi %1, %4 : i32
    %c0_i32 = arith.constant 0 : i32
    %c0_i32_1 = arith.constant 0 : i32
    %c0_i32_2 = arith.constant 0 : i32
    return %0, %5, %c0_i32, %c0_i32_1 : i32, i32, i32, i32
  }
  func.func @transform_6(%arg0: i32, %arg1: i32, %arg2: memref<1xi32, #tpu.memory_space<smem>>) -> (i32, i32, i32) {
    %c1_i32 = arith.constant 1 : i32
    %0 = arith.subi %c1_i32, %arg0 : i32
    %c0_i32 = arith.constant 0 : i32
    %c0_i32_0 = arith.constant 0 : i32
    %c0_i32_1 = arith.constant 0 : i32
    return %0, %c0_i32, %c0_i32_0 : i32, i32, i32
  }
}

</mosaic_0001>

<llo_original>
// kernel: tpu_custom_call.1
$region0: #{tpu_custom_call.1}
  #allocation0 [shape = 'u32[]', space=smem, size = 0x4, offset = 0x4, fixed_abs, tag = 'smem constant byte address 0x4 - core index']
  #allocation1 [shape = 'u32[144,128]{1,0:T(1,128)}', space=vmem, size = 0x12000, scoped, tag = 'internal scratch']
  #allocation2 [shape = 's32[1]{0}', space=sflag, size = 0x4, scoped, tag = 'scoped memory for tpu_custom_call.1']
  #allocation3 [shape = 's32[1]{0:T(128)S(6)}', space=smem, size = 0x200, scoped, tag = 'prefetched SMEM operand 0']
  %s0 = inlined_call_operand.<no memory space> [shape: s32[1], index: 0, kind: input, shape index: {}]
  %s1 = inlined_call_operand.vmem [shape: s32[2,1], index: 1, kind: input, shape index: {}]
  %s2 = inlined_call_operand.hbm [shape: f32[2,12,2,96], index: 2, kind: input, shape index: {}]
  %s3 = inlined_call_operand.vmem [shape: f32[2,2,32], index: 3, kind: input, shape index: {}]
  %s4 = inlined_call_operand.hbm [shape: bf16[2,32,96], index: 4, kind: input, shape index: {}]
  %s5 = inlined_call_operand.vmem [shape: f32[2,1,32], index: 5, kind: input, shape index: {}]
  %s6 = inlined_call_operand.hbm [shape: f32[2,12,2,32], index: 6, kind: output, shape index: {0}]
  %s7 = inlined_call_operand.hbm [shape: f32[2,2,32], index: 7, kind: output, shape index: {1}]
  %8 = xla_tuple %s6, %s7
  %s9 = sld [smem:[#allocation0]]
  $region81: #{tpu_custom_call.1} parent=0
    _
  %s11 = ssub.s32 1, %s9
  %s12 = scalar_select 0, %s11, %s9
  %13 = sst [smem:[#allocation3]] %s0
  $region1: #{tpu_custom_call.1} parent=0
    #allocation4 [shape = 'u8[8192]{0}', space=vmem, size = 0x2000, scoped, tag = 'input window, operand 2']
    #allocation5 [shape = 's32[2]{0}', space=sflag, size = 0x8, scoped, tag = 'scoped memory for tpu_custom_call.1']
    #allocation6 [shape = 's32[2]{0}', space=sflag, size = 0x8, scoped, tag = 'scoped memory for tpu_custom_call.1']
    #allocation7 [shape = 'u8[8192]{0}', space=vmem, size = 0x2000, scoped, tag = 'input window, operand 4, single buffered']
    #allocation8 [shape = 's32[1]{0}', space=sflag, size = 0x4, scoped, tag = 'scoped memory for tpu_custom_call.1']
    #allocation9 [shape = 'u8[8192]{0}', space=vmem, size = 0x2000, scoped, tag = 'output window, operand 0']
    #allocation10 [shape = 'u8[2048]{0}', space=vmem, size = 0x800, scoped, tag = 'output window, operand 1']
    #allocation11 [shape = 's32[2]{0}', space=sflag, size = 0x8, scoped, tag = 'scoped memory for tpu_custom_call.1']
    %14 = vsyncpa [#allocation5], 0
    %s15 = scalar_lea.sflag [#allocation5], 1
    %16 = vsyncpa %s15, 0
    %17 = vsyncpa [#allocation8], 0
    %18 = vsyncpa [#allocation6], 0
    %s19 = scalar_lea.sflag [#allocation6], 1
    %20 = vsyncpa %s19, 0
    %21 = vsyncpa [#allocation11], 0
    %s22 = scalar_lea.sflag [#allocation11], 1
    %23 = vsyncpa %s22, 0
    loop: start=0, step=1, limit=8
    $region2: #{tpu_custom_call.1} parent=1 // loop_pre_header
      _
    $region3: #{tpu_custom_call.1} parent=1 // loop_header
      %s25 = sphi 0, %s29
      %p26 = scmp.ge.s32.totalorder %s25, 8
      %s32 = sphi 0, %s44
      %s33 = sphi 0, %s40
      %s34 = sphi 0, %s32
      %s35 = sphi 0, %s33
      %s36 = sphi 0, %s34
      %s37 = sphi 0, %s35
      %s45 = sphi 0, %s45
      %s47 = sphi 0, %s45
      %s48 = sphi 0, %s47
      %s62 = sphi 0, %s48
      %s80 = sphi 0, %s82
      %s83 = sphi 0, %s80
      %s84 = sphi 0, %s83
      %s100 = sphi 0, %s84
      %s108 = sphi 0, %s110
      %s111 = sphi 0, %s108
      %s112 = sphi 0, %s111
      %s128 = sphi 0, %s112
      %s136 = sphi 0, %s138
      %s139 = sphi 0, %s136
      %s140 = sphi 0, %s139
      %s156 = sphi 0, %s140
      %s164 = sphi 0, %s166
      %s167 = sphi 0, %s164
      %s168 = sphi 0, %s167
      %s184 = sphi 0, %s168
      %s202 = sphi 0, %s204
      %s205 = sphi 0, %s202
      %s206 = sphi 0, %s205
      %s222 = sphi 0, %s206
      %s230 = sphi 0, %s232
      %s233 = sphi 0, %s230
      %s234 = sphi 0, %s233
      %s250 = sphi 0, %s234
    $region4: #{tpu_custom_call.1} parent=1 // loop_header_branch
      %28 = sbr.rel (%p26) target = $region8
    $region5: #{tpu_custom_call.1} parent=1 // loop_body
      %s30 = ssub.s32 %s25, 1
      %s31 = ssub.s32 %s25, 2
      %s38 = sadd.s32 1, %s33
      %p39 = scmp.ge.s32.totalorder %s38, 3
      %s40 = scalar_select %p39, 0, %s38
      %s41 = sadd.s32 1, %s32
      %s42 = scalar_select %p39, %s41, %s32
      %p43 = scmp.ge.s32.totalorder %s42, 2
      %s44 = scalar_select %p43, 0, %s42
      %s46 = sadd.s32 %s45, 1
      %p49 = scmp.eq.s32.totalorder %s25, 5
      %p50 = scmp.ne.s32.totalorder %s45, %s47
      %p51 = scmp.eq.s32.totalorder %s25, 0
      %p52 = por %p50, %p51
      %p53 = scmp.ne.s32.totalorder %s45, %s47
      %p54 = scmp.eq.s32.totalorder %s30, 5
      %p55 = por %p53, %p54
      %p56 = scmp.ne.s32.totalorder %s47, %s48
      %p57 = scmp.eq.s32.totalorder %s30, 0
      %p58 = por %p56, %p57
      %p59 = scmp.ne.s32.totalorder %s47, %s48
      %p60 = scmp.eq.s32.totalorder %s31, 5
      %p61 = por %p59, %p60
      %p63 = scmp.ne.s32.totalorder %s48, %s62
      %p64 = scmp.eq.s32.totalorder %s31, 0
      %p65 = por %p63, %p64
      %s66 = ssub.s32 1, %s32
      %s67 = smul.u32 %s32, %s33
      %s68 = ssub.s32 2, %s33
      %s69 = smul.u32 %s66, %s68
      %s70 = sadd.s32 %s67, %s69
      %s71 = ssub.s32 1, %s44
      %s72 = smul.u32 %s44, %s40
      %s73 = ssub.s32 2, %s40
      %s74 = smul.u32 %s71, %s73
      %s75 = sadd.s32 %s72, %s74
      %s76 = ssub.s32 %s66, %s71
      %s77 = ssub.s32 %s70, %s75
      %s78 = sor.u32 %s76, %s77
      %p79 = scmp.eq.s32.totalorder %s78, 0
      %s81 = sadd.s32 %s80, 1
      %s82 = scalar_select %p79, %s80, %s81
      %p85 = pneg %p79
      %p86 = scmp.eq.s32.totalorder %s25, 5
      %p87 = por %p85, %p86
      %p88 = scmp.ne.s32.totalorder %s80, %s83
      %p89 = scmp.eq.s32.totalorder %s25, 0
      %p90 = por %p88, %p89
      %p91 = scmp.ne.s32.totalorder %s80, %s83
      %p92 = scmp.eq.s32.totalorder %s30, 5
      %p93 = por %p91, %p92
      %p94 = scmp.ne.s32.totalorder %s83, %s84
      %p95 = scmp.eq.s32.totalorder %s30, 0
      %p96 = por %p94, %p95
      %p97 = scmp.ne.s32.totalorder %s83, %s84
      %p98 = scmp.eq.s32.totalorder %s31, 5
      %p99 = por %p97, %p98
      %p101 = scmp.ne.s32.totalorder %s84, %s100
      %p102 = scmp.eq.s32.totalorder %s31, 0
      %p103 = por %p101, %p102
      %s104 = ssub.s32 1, %s32
      %s105 = ssub.s32 1, %s44
      %s106 = ssub.s32 %s104, %s105
      %p107 = scmp.eq.s32.totalorder %s106, 0
      %s109 = sadd.s32 %s108, 1
      %s110 = scalar_select %p107, %s108, %s109
      %p113 = pneg %p107
      %p114 = scmp.eq.s32.totalorder %s25, 5
      %p115 = por %p113, %p114
      %p116 = scmp.ne.s32.totalorder %s108, %s111
      %p117 = scmp.eq.s32.totalorder %s25, 0
      %p118 = por %p116, %p117
      %p119 = scmp.ne.s32.totalorder %s108, %s111
      %p120 = scmp.eq.s32.totalorder %s30, 5
      %p121 = por %p119, %p120
      %p122 = scmp.ne.s32.totalorder %s111, %s112
      %p123 = scmp.eq.s32.totalorder %s30, 0
      %p124 = por %p122, %p123
      %p125 = scmp.ne.s32.totalorder %s111, %s112
      %p126 = scmp.eq.s32.totalorder %s31, 5
      %p127 = por %p125, %p126
      %p129 = scmp.ne.s32.totalorder %s112, %s128
      %p130 = scmp.eq.s32.totalorder %s31, 0
      %p131 = por %p129, %p130
      %s132 = ssub.s32 1, %s32
      %s133 = ssub.s32 1, %s44
      %s134 = ssub.s32 %s132, %s133
      %p135 = scmp.eq.s32.totalorder %s134, 0
      %s137 = sadd.s32 %s136, 1
      %s138 = scalar_select %p135, %s136, %s137
      %p141 = pneg %p135
      %p142 = scmp.eq.s32.totalorder %s25, 5
      %p143 = por %p141, %p142
      %p144 = scmp.ne.s32.totalorder %s136, %s139
      %p145 = scmp.eq.s32.totalorder %s25, 0
      %p146 = por %p144, %p145
      %p147 = scmp.ne.s32.totalorder %s136, %s139
      %p148 = scmp.eq.s32.totalorder %s30, 5
      %p149 = por %p147, %p148
      %p150 = scmp.ne.s32.totalorder %s139, %s140
      %p151 = scmp.eq.s32.totalorder %s30, 0
      %p152 = por %p150, %p151
      %p153 = scmp.ne.s32.totalorder %s139, %s140
      %p154 = scmp.eq.s32.totalorder %s31, 5
      %p155 = por %p153, %p154
      %p157 = scmp.ne.s32.totalorder %s140, %s156
      %p158 = scmp.eq.s32.totalorder %s31, 0
      %p159 = por %p157, %p158
      %s160 = ssub.s32 1, %s32
      %s161 = ssub.s32 1, %s44
      %s162 = ssub.s32 %s160, %s161
      %p163 = scmp.eq.s32.totalorder %s162, 0
      %s165 = sadd.s32 %s164, 1
      %s166 = scalar_select %p163, %s164, %s165
      %p169 = pneg %p163
      %p170 = scmp.eq.s32.totalorder %s25, 5
      %p171 = por %p169, %p170
      %p172 = scmp.ne.s32.totalorder %s164, %s167
      %p173 = scmp.eq.s32.totalorder %s25, 0
      %p174 = por %p172, %p173
      %p175 = scmp.ne.s32.totalorder %s164, %s167
      %p176 = scmp.eq.s32.totalorder %s30, 5
      %p177 = por %p175, %p176
      %p178 = scmp.ne.s32.totalorder %s167, %s168
      %p179 = scmp.eq.s32.totalorder %s30, 0
      %p180 = por %p178, %p179
      %p181 = scmp.ne.s32.totalorder %s167, %s168
      %p182 = scmp.eq.s32.totalorder %s31, 5
      %p183 = por %p181, %p182
      %p185 = scmp.ne.s32.totalorder %s168, %s184
      %p186 = scmp.eq.s32.totalorder %s31, 0
      %p187 = por %p185, %p186
      %s188 = ssub.s32 1, %s32
      %s189 = smul.u32 %s32, %s33
      %s190 = ssub.s32 2, %s33
      %s191 = smul.u32 %s188, %s190
      %s192 = sadd.s32 %s189, %s191
      %s193 = ssub.s32 1, %s44
      %s194 = smul.u32 %s44, %s40
      %s195 = ssub.s32 2, %s40
      %s196 = smul.u32 %s193, %s195
      %s197 = sadd.s32 %s194, %s196
      %s198 = ssub.s32 %s188, %s193
      %s199 = ssub.s32 %s192, %s197
      %s200 = sor.u32 %s198, %s199
      %p201 = scmp.eq.s32.totalorder %s200, 0
      %s203 = sadd.s32 %s202, 1
      %s204 = scalar_select %p201, %s202, %s203
      %p207 = pneg %p201
      %p208 = scmp.eq.s32.totalorder %s25, 5
      %p209 = por %p207, %p208
      %p210 = scmp.ne.s32.totalorder %s202, %s205
      %p211 = scmp.eq.s32.totalorder %s25, 0
      %p212 = por %p210, %p211
      %p213 = scmp.ne.s32.totalorder %s202, %s205
      %p214 = scmp.eq.s32.totalorder %s30, 5
      %p215 = por %p213, %p214
      %p216 = scmp.ne.s32.totalorder %s205, %s206
      %p217 = scmp.eq.s32.totalorder %s30, 0
      %p218 = por %p216, %p217
      %p219 = scmp.ne.s32.totalorder %s205, %s206
      %p220 = scmp.eq.s32.totalorder %s31, 5
      %p221 = por %p219, %p220
      %p223 = scmp.ne.s32.totalorder %s206, %s222
      %p224 = scmp.eq.s32.totalorder %s31, 0
      %p225 = por %p223, %p224
      %s226 = ssub.s32 1, %s32
      %s227 = ssub.s32 1, %s44
      %s228 = ssub.s32 %s226, %s227
      %p229 = scmp.eq.s32.totalorder %s228, 0
      %s231 = sadd.s32 %s230, 1
      %s232 = scalar_select %p229, %s230, %s231
      %p235 = pneg %p229
      %p236 = scmp.eq.s32.totalorder %s25, 5
      %p237 = por %p235, %p236
      %p238 = scmp.ne.s32.totalorder %s230, %s233
      %p239 = scmp.eq.s32.totalorder %s25, 0
      %p240 = por %p238, %p239
      %p241 = scmp.ne.s32.totalorder %s230, %s233
      %p242 = scmp.eq.s32.totalorder %s30, 5
      %p243 = por %p241, %p242
      %p244 = scmp.ne.s32.totalorder %s233, %s234
      %p245 = scmp.eq.s32.totalorder %s30, 0
      %p246 = por %p244, %p245
      %p247 = scmp.ne.s32.totalorder %s233, %s234
      %p248 = scmp.eq.s32.totalorder %s31, 5
      %p249 = por %p247, %p248
      %p251 = scmp.ne.s32.totalorder %s234, %s250
      %p252 = scmp.eq.s32.totalorder %s31, 0
      %p253 = por %p251, %p252
      %p254 = scmp.le.s32.totalorder 1, %s25
      %p255 = scmp.lt.s32.totalorder %s25, 7
      %p256 = pnand %p254, %p255
      %p257 = pneg %p256
      // Predicated region
      $region9: #{tpu_custom_call.1} parent=5 // pred_check
        _
      $region10: #{tpu_custom_call.1} parent=5 // pred_check_branch
        %259 = sbr.rel (%p256) target = $region12
      $region11: #{tpu_custom_call.1} parent=5 // pred_region
        %s260 = ssub.s32 %s25, 1
        // Predicated region
        $region13: #{tpu_custom_call.1} parent=11 // pred_check
          %p261 = pneg %p58
        $region14: #{tpu_custom_call.1} parent=11 // pred_check_branch
          %263 = sbr.rel (%p261) target = $region16
        $region15: #{tpu_custom_call.1} parent=11 // pred_region
          _
        $region16: #{tpu_custom_call.1} parent=11 // pred_fallthru
          _
        // Predicated region
        $region17: #{tpu_custom_call.1} parent=11 // pred_check
          %p264 = pneg %p124
        $region18: #{tpu_custom_call.1} parent=11 // pred_check_branch
          %266 = sbr.rel (%p264) target = $region20
        $region19: #{tpu_custom_call.1} parent=11 // pred_region
          %s267 = ssub.s32 1, %s34
          %p268 = scmp.lt.s32.totalorder %s267, 1
          %s269 = scalar_select %p268, %s267, 1
          %s270 = smul.addr %s269, 2
          %s271 = scalar_lea.vmem %s3, %s270
          %s272 = ssub.s32 1, %s34
        $region20: #{tpu_custom_call.1} parent=11 // pred_fallthru
          _
        // Predicated region
        $region21: #{tpu_custom_call.1} parent=11 // pred_check
          %p273 = pneg %p152
        $region22: #{tpu_custom_call.1} parent=11 // pred_check_branch
          %275 = sbr.rel (%p273) target = $region24
        $region23: #{tpu_custom_call.1} parent=11 // pred_region
          %s276 = ssub.s32 1, %s34
          %s278 = ssub.s32 256, 256
          %279 = vsyncadd [#allocation8], %s278
          %s280 = smul.addr %s276, 4
          %s281 = smul.addr %s280, 64
          %s282 = scalar_lea.hbm %s4, %s281
          %s283 = sshll.u32 [#allocation7], 4
          %s284 = int_to_ptr.vmem [resolvable:$true] %s283
          %289 = dma.hbm_to_vmem [thread:$0]  %s282, 256, %s284, [#allocation8], 64, 64, 4
        $region24: #{tpu_custom_call.1} parent=11 // pred_fallthru
          _
        // Predicated region
        $region25: #{tpu_custom_call.1} parent=11 // pred_check
          %p290 = pneg %p180
        $region26: #{tpu_custom_call.1} parent=11 // pred_check_branch
          %292 = sbr.rel (%p290) target = $region28
        $region27: #{tpu_custom_call.1} parent=11 // pred_region
          %s293 = ssub.s32 1, %s34
          %p294 = scmp.lt.s32.totalorder %s293, 1
          %s295 = scalar_select %p294, %s293, 1
          %s296 = scalar_lea.vmem %s5, %s295
          %s297 = ssub.s32 1, %s34
        $region28: #{tpu_custom_call.1} parent=11 // pred_fallthru
          _
      $region12: #{tpu_custom_call.1} parent=5 // pred_fallthru
        _
      %p298 = scmp.lt.s32.totalorder %s25, 6
      // Predicated region
      $region29: #{tpu_custom_call.1} parent=5 // pred_check
        %p299 = pneg %p298
      $region30: #{tpu_custom_call.1} parent=5 // pred_check_branch
        %301 = sbr.rel (%p299) target = $region32
      $region31: #{tpu_custom_call.1} parent=5 // pred_region
        // Predicated region
        $region33: #{tpu_custom_call.1} parent=31 // pred_check
          %p302 = pneg %p90
        $region34: #{tpu_custom_call.1} parent=31 // pred_check_branch
          %304 = sbr.rel (%p302) target = $region36
        $region35: #{tpu_custom_call.1} parent=31 // pred_region
          %s305 = sand.u32 %s80, 1
          %s306 = scalar_lea.sflag [#allocation5], %s305
          %s307 = sand.u32 %s80, 1
          %s308 = smul.addr %s307, 8
          %s309 = scalar_lea.vmem [#allocation4], %s308
          %s310 = ssub.s32 1, %s32
          %s311 = smul.u32 %s32, %s33
          %s312 = ssub.s32 2, %s33
          %s313 = smul.u32 %s310, %s312
          %s314 = sadd.s32 %s311, %s313
          %s315 = smul.u32 4, %s314
          %s317 = ssub.s32 128, 128
          %318 = vsyncadd %s306, %s317
          %s319 = smul.addr %s310, 12
          %s320 = sadd.s32 %s315, %s319
          %s321 = smul.addr %s320, 32
          %s322 = scalar_lea.hbm %s2, %s321
          %s323 = sshll.u32 %s309, 4
          %s324 = int_to_ptr.vmem [resolvable:$true] %s323
          %329 = dma.hbm_to_vmem [thread:$0]  %s322, 128, %s324, %s306, 32, 32, 2
        $region36: #{tpu_custom_call.1} parent=31 // pred_fallthru
          _
      $region32: #{tpu_custom_call.1} parent=5 // pred_fallthru
        _
      %p330 = scmp.le.s32.totalorder 1, %s25
      %p331 = scmp.lt.s32.totalorder %s25, 7
      %p332 = pnand %p330, %p331
      %p333 = pneg %p332
      // Predicated region
      $region37: #{tpu_custom_call.1} parent=5 // pred_check
        _
      $region38: #{tpu_custom_call.1} parent=5 // pred_check_branch
        %335 = sbr.rel (%p332) target = $region40
      $region39: #{tpu_custom_call.1} parent=5 // pred_region
        %s336 = ssub.s32 %s25, 1
        %s337 = sand.u32 %s83, 1
        %s338 = scalar_lea.sflag [#allocation5], %s337
        %s339 = sand.u32 %s83, 1
        %s340 = smul.addr %s339, 8
        %s341 = scalar_lea.vmem [#allocation4], %s340
        // Predicated region
        $region41: #{tpu_custom_call.1} parent=39 // pred_check
          %p342 = pneg %p96
        $region42: #{tpu_custom_call.1} parent=39 // pred_check_branch
          %344 = sbr.rel (%p342) target = $region44
        $region43: #{tpu_custom_call.1} parent=39 // pred_region
          %345 = dma.done %s338, 128
        $region44: #{tpu_custom_call.1} parent=39 // pred_fallthru
          _
        // Predicated region
        $region45: #{tpu_custom_call.1} parent=39 // pred_check
          %p346 = pneg %p152
        $region46: #{tpu_custom_call.1} parent=39 // pred_check_branch
          %348 = sbr.rel (%p346) target = $region48
        $region47: #{tpu_custom_call.1} parent=39 // pred_region
          %349 = dma.done [#allocation8], 256
        $region48: #{tpu_custom_call.1} parent=39 // pred_fallthru
          _
        %p350 = pneg %p58
        %p351 = pneg %p55
        %s352 = sand.u32 %s83, 1
        %s353 = scalar_lea.sflag [#allocation5], %s352
        %s354 = sand.u32 %s83, 1
        %s355 = smul.addr %s354, 8
        %s356 = scalar_lea.vmem [#allocation4], %s355
        %p357 = pneg %p96
        %p358 = pneg %p93
        %s359 = ssub.s32 1, %s34
        %p360 = scmp.lt.s32.totalorder %s359, 1
        %s361 = scalar_select %p360, %s359, 1
        %s362 = smul.addr %s361, 2
        %s363 = scalar_lea.vmem %s3, %s362
        %p364 = pneg %p124
        %p365 = pneg %p121
        %p366 = pneg %p152
        %p367 = pneg %p149
        %s368 = ssub.s32 1, %s34
        %p369 = scmp.lt.s32.totalorder %s368, 1
        %s370 = scalar_select %p369, %s368, 1
        %s371 = scalar_lea.vmem %s5, %s370
        %p372 = pneg %p180
        %p373 = pneg %p177
        %p374 = pneg %p218
        %p375 = pneg %p215
        %s376 = sand.u32 %s205, 1
        %s377 = scalar_lea.sflag [#allocation6], %s376
        %s378 = sand.u32 %s205, 1
        %s379 = smul.addr %s378, 8
        %s380 = scalar_lea.vmem [#allocation9], %s379
        %p381 = pneg %p246
        %p382 = pneg %p243
        %s383 = sand.u32 %s233, 1
        %s384 = scalar_lea.sflag [#allocation11], %s383
        %s385 = sand.u32 %s233, 1
        %s386 = smul.addr %s385, 2
        %s387 = scalar_lea.vmem [#allocation10], %s386
        %s388 = ssub.s32 1, %s34
        %s389 = smul.u32 %s34, %s35
        %s390 = ssub.s32 2, %s35
        %s391 = smul.u32 %s388, %s390
        %s392 = sadd.s32 %s389, %s391
        %s393 = smul.u32 4, %s392
        %s394 = ssub.s32 1, %s34
        %p395 = scmp.lt.s32.totalorder %s394, 1
        %s396 = scalar_select %p395, %s394, 1
        %s397 = smul.addr %s396, 2
        %s398 = scalar_lea.vmem %s3, %s397
        %s399 = ssub.s32 1, %s34
        %s400 = ssub.s32 1, %s34
        %s401 = ssub.s32 1, %s34
        %p402 = scmp.lt.s32.totalorder %s401, 1
        %s403 = scalar_select %p402, %s401, 1
        %s404 = scalar_lea.vmem %s5, %s403
        %s405 = ssub.s32 1, %s34
        %s406 = ssub.s32 1, %s34
        %s407 = smul.u32 %s34, %s35
        %s408 = ssub.s32 2, %s35
        %s409 = smul.u32 %s406, %s408
        %s410 = sadd.s32 %s407, %s409
        %s411 = smul.u32 4, %s410
        %s412 = ssub.s32 1, %s34
        %p414 = scmp.eq.s32.totalorder %s35, 0
        // Predicated region
        $region49: #{tpu_custom_call.1} parent=39 // pred_check
          %p415 = pneg %p414
        $region50: #{tpu_custom_call.1} parent=39 // pred_check_branch
          %417 = sbr.rel (%p415) target = $region52
        $region51: #{tpu_custom_call.1} parent=39 // pred_region
          %v418 = vld [vmem:[%s398] sm:$0x3]
          %vm419 = vcmask 254976
          %420 = vst.msk [vmem:[%s387] sm:$0x3] %vm419, %v418
        $region52: #{tpu_custom_call.1} parent=39 // pred_fallthru
          _
        %s421 = smul.u32 %s34, %s35
        %s422 = ssub.s32 1, %s34
        %s423 = ssub.s32 2, %s35
        %s424 = smul.u32 %s422, %s423
        %s425 = sadd.s32 %s421, %s424
        %s426 = smul.u32 %s425, 4
        %s427 = sld [smem:[#allocation3]]
        %p428 = scmp.ge.s32.totalorder %s426, %s427
        // Predicated region
        $region53: #{tpu_custom_call.1} parent=39 // pred_check
          %p429 = pneg %p428
        $region54: #{tpu_custom_call.1} parent=39 // pred_check_branch
          %431 = sbr.rel (%p429) target = $region56
        $region55: #{tpu_custom_call.1} parent=39 // pred_region
          %vm432 = vcmask 254976
          %433 = vst.msk [vmem:[%s380] sm:$0x3] %vm432, 0.0
          %434 = vst.msk [vmem:[%s380 + $0x2] sm:$0x3] %vm432, 0.0
          %435 = vst.msk [vmem:[%s380 + $0x4] sm:$0x3] %vm432, 0.0
          %436 = vst.msk [vmem:[%s380 + $0x6] sm:$0x3] %vm432, 0.0
        $region56: #{tpu_custom_call.1} parent=39 // pred_fallthru
          _
        %p437 = scmp.lt.s32.totalorder %s426, %s427
        // Predicated region
        $region57: #{tpu_custom_call.1} parent=39 // pred_check
          %p438 = pneg %p437
        $region58: #{tpu_custom_call.1} parent=39 // pred_check_branch
          %440 = sbr.rel (%p438) target = $region60
        $region59: #{tpu_custom_call.1} parent=39 // pred_region
          %v441 = vld [vmem:[%s1] sm:$0x3]
          %v442 = vld [vmem:[#allocation7] sm:$0xf]
          %v443 = vld [vmem:[#allocation7 + $0x4] sm:$0xf]
          %v444 = vld [vmem:[#allocation7 + $0x8] sm:$0xf]
          %v445 = vld [vmem:[#allocation7 + $0xc] sm:$0xf]
          %v446 = vld [vmem:[%s404] sm:$0x1]
          %v447 = vld [vmem:[%s387] sm:$0x3]
          %s448 = smul.u32 %s422, 3
          %s449 = sadd.s32 %s426, %s448
          %v450 = vstv %s449
          %vm451 = vcmp.lt.s32.totalorder %v450, %v441
          %s452 = smul.u32 %s448, 2
          %s453 = scalar_lea.vmem %s341, %s452 [#allocation4]
          %v454 = vld [vmem:[%s453] sm:$0x3]
          %v455 = vpack.c.bf16 %v447, %v447
          %v460 = vunpack.c.l.b16 %v442
          %v461 = vunpack.c.l.b16 %v443
          %v462 = vunpack.c.l.b16 %v444
          %v463 = vunpack.c.l.b16 %v445
          %v464 = vpack.c.b16 %v461, %v460
          %v465 = vpack.c.b16 %v463, %v462
          %vm468 = vcmask 261120
          %v470 = vsel %vm468, %v455, 0
          %472 = vmatprep.subr.bf16.mxu0 0
          %473 = vmatpush1.bf16.msra.mxu0 %v464
          %474 = vmatprep.subr.bf16.mxu0 0
          %475 = vmatpush1.bf16.msra.mxu0 %v465
          %476 = vmatprep.subr.bf16.mxu0 0
          %477 = vmatpush1.bf16.msra.mxu0 0
          %478 = vmatprep.subr.bf16.mxu0 0
          %479 = vmatpush1.bf16.msra.mxu0 0
          %480 = vmatprep.subr.bf16.mxu0 0
          %481 = vmatpush1.bf16.msra.mxu0 0
          %482 = vmatprep.subr.bf16.mxu0 0
          %483 = vmatpush1.bf16.msra.mxu0 0
          %484 = vmatprep.subr.bf16.mxu0 0
          %485 = vmatpush1.bf16.msra.mxu0 0
          %486 = vmatprep.subr.bf16.mxu0 0
          %487 = vmatpush1.bf16.msra.mxu0 0
          %488 = vmatprep.subr.bf16.mxu0 0
          %489 = vmatpush1.bf16.msra.mxu0 0
          %490 = vmatprep.subr.bf16.mxu0 0
          %491 = vmatpush1.bf16.msra.mxu0 0
          %492 = vmatprep.subr.bf16.mxu0 0
          %493 = vmatpush1.bf16.msra.mxu0 0
          %494 = vmatprep.subr.bf16.mxu0 0
          %495 = vmatpush1.bf16.msra.mxu0 0
          %496 = vmatprep.subr.bf16.mxu0 0
          %497 = vmatpush1.bf16.msra.mxu0 0
          %498 = vmatprep.subr.bf16.mxu0 0
          %499 = vmatpush1.bf16.msra.mxu0 0
          %500 = vmatprep.subr.bf16.mxu0 0
          %501 = vmatpush1.bf16.msra.mxu0 0
          %502 = vmatprep.subr.bf16.mxu0 0
          %503 = vmatpush1.bf16.msra.mxu0 0
          %504 = vmatprep.mubr.bf16.mxu0 0
          %505 = vmatmul.mubr.bf16.gmra.mrb[0].mxu0 %v470
          %v506 = vpop.f32.mrb[0].mxu0
          %v507 = vadd.f32 0.0, %v506
          %v508 = vpop.f32.mrb[0].mxu0
          %v509 = vpop.f32.mrb[0].mxu0
          %v510 = vpop.f32.mrb[0].mxu0
          %511 = vdwg.mxu0
          %v512 = vadd.f32 %v454, %v507
          %v513 = vxor.u32 %v512, 2147483648
          %v514 = vmul.f32 %v513, 1.442695
          %v515 = vpow.pop %v514
          %v516 = vadd.f32 %v515, 1.0
          %v517 = vrcp.pop %v516
          %v518 = vmul.f32 1.0, %v517
          %v520 = vlaneseq
          %v521 = vshrl.u32 %v520, 7
          %v522 = vsub.s32 0, %v521
          %v523 = vrot.slane %v446, %v522
          %524 = vrot.lane.b32.xlu0 %v523, 64
          %v525 = vpop.permute.xlu0 %524
          %v527 = vadd.f32 %v507, %v525
          %529 = vrot.lane.b32.xlu0 %v527, 64
          %v530 = vpop.permute.xlu0 %529
          %v532 = vmul.f32 %v518, %v530
          %534 = vrot.lane.b32.xlu0 %v532, 64
          %v535 = vpop.permute.xlu0 %534
          %v537 = vadd.f32 %v454, %v535
          %v538 = vtanh.pop %v537
          %540 = vrot.lane.b32.xlu0 %v538, 64
          %v541 = vpop.permute.xlu0 %540
          %v543 = vsub.f32 %v447, %v541
          %545 = vrot.lane.b32.xlu0 %v543, 32
          %v546 = vpop.permute.xlu0 %545
          %v548 = vmul.f32 %v518, %v546
          %550 = vrot.lane.b32.xlu0 %v548, 32
          %v551 = vpop.permute.xlu0 %550
          %v553 = vadd.f32 %v538, %v551
          %v554 = vsel %vm451, 1, 0
          %555 = vset.pattern.permute.xlu0 0
          %556 = vperm.xlu0 %555, %v554
          %v557 = vpop.permute.xlu0 %556
          %vm558 = vcmp.eq.s32.totalorder %v557, 1
          %560 = vrot.lane.b32.xlu0 %v447, 64
          %v561 = vpop.permute.xlu0 %560
          %v563 = vsel %vm558, %v553, %v561
          %v564 = vsel %vm558, %v553, 0.0
          %566 = vrot.lane.b32.xlu0 %v564, 64
          %v567 = vpop.permute.xlu0 %566
          %s569 = scalar_lea.vmem %s380, %s452 [#allocation9]
          %vm570 = vcmask 254976
          %571 = vst.msk [vmem:[%s569] sm:$0x3] %vm570, %v567
          %s572 = smul.u32 %s422, 2
          %s573 = sadd.s32 %s34, %s572
          %s574 = sadd.s32 %s426, %s573
          %v575 = vstv %s574
          %vm576 = vcmp.lt.s32.totalorder %v575, %v441
          %s577 = smul.u32 %s573, 2
          %s578 = scalar_lea.vmem %s341, %s577 [#allocation4]
          %v579 = vld [vmem:[%s578] sm:$0x3]
          %v580 = vpack.c.bf16 %v563, %v563
          %582 = vrot.lane.b32.xlu0 %v580, 64
          %v583 = vpop.permute.xlu0 %582
          %v585 = vsel %vm468, %v583, 0
          %587 = vmatprep.subr.bf16.mxu0 0
          %588 = vmatpush1.bf16.msra.mxu0 %v464
          %589 = vmatprep.subr.bf16.mxu0 0
          %590 = vmatpush1.bf16.msra.mxu0 %v465
          %591 = vmatprep.subr.bf16.mxu0 0
          %592 = vmatpush1.bf16.msra.mxu0 0
          %593 = vmatprep.subr.bf16.mxu0 0
          %594 = vmatpush1.bf16.msra.mxu0 0
          %595 = vmatprep.subr.bf16.mxu0 0
          %596 = vmatpush1.bf16.msra.mxu0 0
          %597 = vmatprep.subr.bf16.mxu0 0
          %598 = vmatpush1.bf16.msra.mxu0 0
          %599 = vmatprep.subr.bf16.mxu0 0
          %600 = vmatpush1.bf16.msra.mxu0 0
          %601 = vmatprep.subr.bf16.mxu0 0
          %602 = vmatpush1.bf16.msra.mxu0 0
          %603 = vmatprep.subr.bf16.mxu0 0
          %604 = vmatpush1.bf16.msra.mxu0 0
          %605 = vmatprep.subr.bf16.mxu0 0
          %606 = vmatpush1.bf16.msra.mxu0 0
          %607 = vmatprep.subr.bf16.mxu0 0
          %608 = vmatpush1.bf16.msra.mxu0 0
          %609 = vmatprep.subr.bf16.mxu0 0
          %610 = vmatpush1.bf16.msra.mxu0 0
          %611 = vmatprep.subr.bf16.mxu0 0
          %612 = vmatpush1.bf16.msra.mxu0 0
          %613 = vmatprep.subr.bf16.mxu0 0
          %614 = vmatpush1.bf16.msra.mxu0 0
          %615 = vmatprep.subr.bf16.mxu0 0
          %616 = vmatpush1.bf16.msra.mxu0 0
          %617 = vmatprep.subr.bf16.mxu0 0
          %618 = vmatpush1.bf16.msra.mxu0 0
          %619 = vmatprep.mubr.bf16.mxu0 0
          %620 = vmatmul.mubr.bf16.gmra.mrb[0].mxu0 %v585
          %v621 = vpop.f32.mrb[0].mxu0
          %v622 = vadd.f32 0.0, %v621
          %v623 = vpop.f32.mrb[0].mxu0
          %v624 = vpop.f32.mrb[0].mxu0
          %v625 = vpop.f32.mrb[0].mxu0
          %626 = vdwg.mxu0
          %v627 = vadd.f32 %v579, %v622
          %v628 = vxor.u32 %v627, 2147483648
          %v629 = vmul.f32 %v628, 1.442695
          %v630 = vpow.pop %v629
          %v631 = vadd.f32 %v630, 1.0
          %v632 = vrcp.pop %v631
          %v633 = vmul.f32 1.0, %v632
          %v634 = vadd.f32 %v622, %v525
          %636 = vrot.lane.b32.xlu0 %v634, 64
          %v637 = vpop.permute.xlu0 %636
          %v639 = vmul.f32 %v633, %v637
          %641 = vrot.lane.b32.xlu0 %v639, 64
          %v642 = vpop.permute.xlu0 %641
          %v644 = vadd.f32 %v579, %v642
          %v645 = vtanh.pop %v644
          %v646 = vsub.f32 %v563, %v645
          %648 = vrot.lane.b32.xlu0 %v646, 96
          %v649 = vpop.permute.xlu0 %648
          %v651 = vmul.f32 %v633, %v649
          %653 = vrot.lane.b32.xlu0 %v651, 32
          %v654 = vpop.permute.xlu0 %653
          %v656 = vadd.f32 %v645, %v654
          %v657 = vsel %vm576, 1, 0
          %658 = vset.pattern.permute.xlu0 0
          %659 = vperm.xlu0 %658, %v657
          %v660 = vpop.permute.xlu0 %659
          %vm661 = vcmp.eq.s32.totalorder %v660, 1
          %v662 = vsel %vm661, %v656, %v563
          %v663 = vsel %vm661, %v656, 0.0
          %665 = vrot.lane.b32.xlu0 %v663, 64
          %v666 = vpop.permute.xlu0 %665
          %s668 = scalar_lea.vmem %s380, %s577 [#allocation9]
          %669 = vst.msk [vmem:[%s668] sm:$0x3] %vm570, %v666
          %s670 = smul.u32 %s34, 2
          %s671 = sadd.s32 %s670, %s422
          %s672 = sadd.s32 %s426, %s671
          %v673 = vstv %s672
          %vm674 = vcmp.lt.s32.totalorder %v673, %v441
          %s675 = smul.u32 %s671, 2
          %s676 = scalar_lea.vmem %s341, %s675 [#allocation4]
          %v677 = vld [vmem:[%s676] sm:$0x3]
          %v678 = vpack.c.bf16 %v662, %v662
          %680 = vrot.lane.b32.xlu0 %v678, 64
          %v681 = vpop.permute.xlu0 %680
          %v683 = vsel %vm468, %v681, 0
          %685 = vmatprep.subr.bf16.mxu0 0
          %686 = vmatpush1.bf16.msra.mxu0 %v464
          %687 = vmatprep.subr.bf16.mxu0 0
          %688 = vmatpush1.bf16.msra.mxu0 %v465
          %689 = vmatprep.subr.bf16.mxu0 0
          %690 = vmatpush1.bf16.msra.mxu0 0
          %691 = vmatprep.subr.bf16.mxu0 0
          %692 = vmatpush1.bf16.msra.mxu0 0
          %693 = vmatprep.subr.bf16.mxu0 0
          %694 = vmatpush1.bf16.msra.mxu0 0
          %695 = vmatprep.subr.bf16.mxu0 0
          %696 = vmatpush1.bf16.msra.mxu0 0
          %697 = vmatprep.subr.bf16.mxu0 0
          %698 = vmatpush1.bf16.msra.mxu0 0
          %699 = vmatprep.subr.bf16.mxu0 0
          %700 = vmatpush1.bf16.msra.mxu0 0
          %701 = vmatprep.subr.bf16.mxu0 0
          %702 = vmatpush1.bf16.msra.mxu0 0
          %703 = vmatprep.subr.bf16.mxu0 0
          %704 = vmatpush1.bf16.msra.mxu0 0
          %705 = vmatprep.subr.bf16.mxu0 0
          %706 = vmatpush1.bf16.msra.mxu0 0
          %707 = vmatprep.subr.bf16.mxu0 0
          %708 = vmatpush1.bf16.msra.mxu0 0
          %709 = vmatprep.subr.bf16.mxu0 0
          %710 = vmatpush1.bf16.msra.mxu0 0
          %711 = vmatprep.subr.bf16.mxu0 0
          %712 = vmatpush1.bf16.msra.mxu0 0
          %713 = vmatprep.subr.bf16.mxu0 0
          %714 = vmatpush1.bf16.msra.mxu0 0
          %715 = vmatprep.subr.bf16.mxu0 0
          %716 = vmatpush1.bf16.msra.mxu0 0
          %717 = vmatprep.mubr.bf16.mxu0 0
          %718 = vmatmul.mubr.bf16.gmra.mrb[0].mxu0 %v683
          %v719 = vpop.f32.mrb[0].mxu0
          %v720 = vadd.f32 0.0, %v719
          %v721 = vpop.f32.mrb[0].mxu0
          %v722 = vpop.f32.mrb[0].mxu0
          %v723 = vpop.f32.mrb[0].mxu0
          %724 = vdwg.mxu0
          %v725 = vadd.f32 %v677, %v720
          %v726 = vxor.u32 %v725, 2147483648
          %v727 = vmul.f32 %v726, 1.442695
          %v728 = vpow.pop %v727
          %v729 = vadd.f32 %v728, 1.0
          %v730 = vrcp.pop %v729
          %v731 = vmul.f32 1.0, %v730
          %v732 = vadd.f32 %v720, %v525
          %734 = vrot.lane.b32.xlu0 %v732, 64
          %v735 = vpop.permute.xlu0 %734
          %v737 = vmul.f32 %v731, %v735
          %739 = vrot.lane.b32.xlu0 %v737, 64
          %v740 = vpop.permute.xlu0 %739
          %v742 = vadd.f32 %v677, %v740
          %v743 = vtanh.pop %v742
          %v744 = vsub.f32 %v662, %v743
          %746 = vrot.lane.b32.xlu0 %v744, 96
          %v747 = vpop.permute.xlu0 %746
          %v749 = vmul.f32 %v731, %v747
          %751 = vrot.lane.b32.xlu0 %v749, 32
          %v752 = vpop.permute.xlu0 %751
          %v754 = vadd.f32 %v743, %v752
          %v755 = vsel %vm674, 1, 0
          %756 = vset.pattern.permute.xlu0 0
          %757 = vperm.xlu0 %756, %v755
          %v758 = vpop.permute.xlu0 %757
          %vm759 = vcmp.eq.s32.totalorder %v758, 1
          %v760 = vsel %vm759, %v754, %v662
          %v761 = vsel %vm759, %v754, 0.0
          %763 = vrot.lane.b32.xlu0 %v761, 64
          %v764 = vpop.permute.xlu0 %763
          %s766 = scalar_lea.vmem %s380, %s675 [#allocation9]
          %767 = vst.msk [vmem:[%s766] sm:$0x3] %vm570, %v764
          %s768 = smul.u32 %s34, 3
          %s769 = sadd.s32 %s426, %s768
          %v770 = vstv %s769
          %vm771 = vcmp.lt.s32.totalorder %v770, %v441
          %s772 = smul.u32 %s768, 2
          %s773 = scalar_lea.vmem %s341, %s772 [#allocation4]
          %v774 = vld [vmem:[%s773] sm:$0x3]
          %v775 = vpack.c.bf16 %v760, %v760
          %777 = vrot.lane.b32.xlu0 %v775, 64
          %v778 = vpop.permute.xlu0 %777
          %v780 = vsel %vm468, %v778, 0
          %782 = vmatprep.subr.bf16.mxu0 0
          %783 = vmatpush1.bf16.msra.mxu0 %v464
          %784 = vmatprep.subr.bf16.mxu0 0
          %785 = vmatpush1.bf16.msra.mxu0 %v465
          %786 = vmatprep.subr.bf16.mxu0 0
          %787 = vmatpush1.bf16.msra.mxu0 0
          %788 = vmatprep.subr.bf16.mxu0 0
          %789 = vmatpush1.bf16.msra.mxu0 0
          %790 = vmatprep.subr.bf16.mxu0 0
          %791 = vmatpush1.bf16.msra.mxu0 0
          %792 = vmatprep.subr.bf16.mxu0 0
          %793 = vmatpush1.bf16.msra.mxu0 0
          %794 = vmatprep.subr.bf16.mxu0 0
          %795 = vmatpush1.bf16.msra.mxu0 0
          %796 = vmatprep.subr.bf16.mxu0 0
          %797 = vmatpush1.bf16.msra.mxu0 0
          %798 = vmatprep.subr.bf16.mxu0 0
          %799 = vmatpush1.bf16.msra.mxu0 0
          %800 = vmatprep.subr.bf16.mxu0 0
          %801 = vmatpush1.bf16.msra.mxu0 0
          %802 = vmatprep.subr.bf16.mxu0 0
          %803 = vmatpush1.bf16.msra.mxu0 0
          %804 = vmatprep.subr.bf16.mxu0 0
          %805 = vmatpush1.bf16.msra.mxu0 0
          %806 = vmatprep.subr.bf16.mxu0 0
          %807 = vmatpush1.bf16.msra.mxu0 0
          %808 = vmatprep.subr.bf16.mxu0 0
          %809 = vmatpush1.bf16.msra.mxu0 0
          %810 = vmatprep.subr.bf16.mxu0 0
          %811 = vmatpush1.bf16.msra.mxu0 0
          %812 = vmatprep.subr.bf16.mxu0 0
          %813 = vmatpush1.bf16.msra.mxu0 0
          %814 = vmatprep.mubr.bf16.mxu0 0
          %815 = vmatmul.mubr.bf16.gmra.mrb[0].mxu0 %v780
          %v816 = vpop.f32.mrb[0].mxu0
          %v817 = vadd.f32 0.0, %v816
          %v818 = vpop.f32.mrb[0].mxu0
          %v819 = vpop.f32.mrb[0].mxu0
          %v820 = vpop.f32.mrb[0].mxu0
          %821 = vdwg.mxu0
          %v822 = vadd.f32 %v774, %v817
          %v823 = vxor.u32 %v822, 2147483648
          %v824 = vmul.f32 %v823, 1.442695
          %v825 = vpow.pop %v824
          %v826 = vadd.f32 %v825, 1.0
          %v827 = vrcp.pop %v826
          %v828 = vmul.f32 1.0, %v827
          %v829 = vadd.f32 %v817, %v525
          %831 = vrot.lane.b32.xlu0 %v829, 64
          %v832 = vpop.permute.xlu0 %831
          %v834 = vmul.f32 %v828, %v832
          %836 = vrot.lane.b32.xlu0 %v834, 64
          %v837 = vpop.permute.xlu0 %836
          %v839 = vadd.f32 %v774, %v837
          %v840 = vtanh.pop %v839
          %v841 = vsub.f32 %v760, %v840
          %843 = vrot.lane.b32.xlu0 %v841, 96
          %v844 = vpop.permute.xlu0 %843
          %v846 = vmul.f32 %v828, %v844
          %848 = vrot.lane.b32.xlu0 %v846, 32
          %v849 = vpop.permute.xlu0 %848
          %v851 = vadd.f32 %v840, %v849
          %v852 = vsel %vm771, 1, 0
          %853 = vset.pattern.permute.xlu0 0
          %854 = vperm.xlu0 %853, %v852
          %v855 = vpop.permute.xlu0 %854
          %vm856 = vcmp.eq.s32.totalorder %v855, 1
          %v857 = vsel %vm856, %v851, %v760
          %v858 = vsel %vm856, %v851, 0.0
          %860 = vrot.lane.b32.xlu0 %v858, 64
          %v861 = vpop.permute.xlu0 %860
          %s863 = scalar_lea.vmem %s380, %s772 [#allocation9]
          %864 = vst.msk [vmem:[%s863] sm:$0x3] %vm570, %v861
          %866 = vrot.lane.b32.xlu0 %v857, 64
          %v867 = vpop.permute.xlu0 %866
          %869 = vst.msk [vmem:[%s387] sm:$0x3] %vm570, %v867
        $region60: #{tpu_custom_call.1} parent=39 // pred_fallthru
          _
        %s870 = sand.u32 %s205, 1
        %s871 = scalar_lea.sflag [#allocation6], %s870
        %s872 = sand.u32 %s205, 1
        %s873 = smul.addr %s872, 8
        %s874 = scalar_lea.vmem [#allocation9], %s873
        %s875 = sand.u32 %s233, 1
        %s876 = scalar_lea.sflag [#allocation11], %s875
        %s877 = sand.u32 %s233, 1
        %s878 = smul.addr %s877, 2
        %s879 = scalar_lea.vmem [#allocation10], %s878
        // Predicated region
        $region61: #{tpu_custom_call.1} parent=39 // pred_check
          %p880 = pneg %p215
        $region62: #{tpu_custom_call.1} parent=39 // pred_check_branch
          %882 = sbr.rel (%p880) target = $region64
        $region63: #{tpu_custom_call.1} parent=39 // pred_region
          %s883 = ssub.s32 1, %s34
          %s884 = smul.u32 %s34, %s35
          %s885 = ssub.s32 2, %s35
          %s886 = smul.u32 %s883, %s885
          %s887 = sadd.s32 %s884, %s886
          %s888 = smul.u32 4, %s887
          %s890 = ssub.s32 128, 128
          %891 = vsyncadd %s871, %s890
          %s892 = smul.addr %s883, 12
          %s893 = sadd.s32 %s888, %s892
          %s894 = smul.addr %s893, 32
          %s895 = scalar_lea.hbm %s6, %s894
          %s896 = sshll.u32 %s874, 4
          %s897 = int_to_ptr.vmem [resolvable:$true] %s896
          %902 = dma.vmem_to_hbm [thread:$0]  %s897, 128, %s895, %s871, 32, 32, 2
        $region64: #{tpu_custom_call.1} parent=39 // pred_fallthru
          _
        // Predicated region
        $region65: #{tpu_custom_call.1} parent=39 // pred_check
          %p903 = pneg %p243
        $region66: #{tpu_custom_call.1} parent=39 // pred_check_branch
          %905 = sbr.rel (%p903) target = $region68
        $region67: #{tpu_custom_call.1} parent=39 // pred_region
          %s906 = ssub.s32 1, %s34
          %s908 = ssub.s32 32, 32
          %909 = vsyncadd %s876, %s908
          %s910 = smul.addr %s906, 32
          %s911 = scalar_lea.hbm %s7, %s910
          %s913 = sshll.u32 %s879, 4
          %s914 = int_to_ptr.vmem [resolvable:$true] %s913
          %916 = dma.vmem_to_hbm [thread:$0]  %s914, 32, %s911, %s876
        $region68: #{tpu_custom_call.1} parent=39 // pred_fallthru
          _
      $region40: #{tpu_custom_call.1} parent=5 // pred_fallthru
        _
      %p917 = scmp.le.s32.totalorder 2, %s25
      // Predicated region
      $region69: #{tpu_custom_call.1} parent=5 // pred_check
        %p918 = pneg %p917
      $region70: #{tpu_custom_call.1} parent=5 // pred_check_branch
        %920 = sbr.rel (%p918) target = $region72
      $region71: #{tpu_custom_call.1} parent=5 // pred_region
        %s921 = ssub.s32 %s25, 2
        // Predicated region
        $region73: #{tpu_custom_call.1} parent=71 // pred_check
          %p922 = pneg %p221
        $region74: #{tpu_custom_call.1} parent=71 // pred_check_branch
          %924 = sbr.rel (%p922) target = $region76
        $region75: #{tpu_custom_call.1} parent=71 // pred_region
          %s925 = sand.u32 %s206, 1
          %s926 = scalar_lea.sflag [#allocation6], %s925
          %s927 = sand.u32 %s206, 1
          %s928 = smul.addr %s927, 8
          %s929 = scalar_lea.vmem [#allocation9], %s928
          %930 = dma.done %s926, 128
        $region76: #{tpu_custom_call.1} parent=71 // pred_fallthru
          _
        // Predicated region
        $region77: #{tpu_custom_call.1} parent=71 // pred_check
          %p931 = pneg %p249
        $region78: #{tpu_custom_call.1} parent=71 // pred_check_branch
          %933 = sbr.rel (%p931) target = $region80
        $region79: #{tpu_custom_call.1} parent=71 // pred_region
          %s934 = sand.u32 %s234, 1
          %s935 = scalar_lea.sflag [#allocation11], %s934
          %s936 = sand.u32 %s234, 1
          %s937 = smul.addr %s936, 2
          %s938 = scalar_lea.vmem [#allocation10], %s937
          %939 = dma.done %s935, 32
        $region80: #{tpu_custom_call.1} parent=71 // pred_fallthru
          _
      $region72: #{tpu_custom_call.1} parent=5 // pred_fallthru
        _
    $region6: #{tpu_custom_call.1} parent=1 // loop_footer
      %s29 = sadd.s32 1, %s25
    $region7: #{tpu_custom_call.1} parent=1 // loop_footer_branch
      %24 = sbr.rel target = $region3
    $region8: #{tpu_custom_call.1} parent=1 // loop_exit
      _
    %940 = vsyncpa [#allocation5], 1
    %s941 = scalar_lea.sflag [#allocation5], 1
    %942 = vsyncpa %s941, 1
    %943 = vsyncpa [#allocation8], 1
    %944 = vsyncpa [#allocation6], 1
    %s945 = scalar_lea.sflag [#allocation6], 1
    %946 = vsyncpa %s945, 1
    %947 = vsyncpa [#allocation11], 1
    %s948 = scalar_lea.sflag [#allocation11], 1
    %949 = vsyncpa %s948, 1

</llo_original>
